<compile_context>
chip_gen: v7x
topology: tpu7x:2x2x1
jax: 0.10.0
libtpu: 0.0.40
codegen_flags: <defaults>
</compile_context>

<pallas_src>
import functools

import jax
import jax.numpy as jnp
from jax.experimental import pallas as pl
from jax.experimental.pallas import tpu as pltpu


def _round_up(x, m):
    return (x + m - 1) // m * m


def _cdiv(a, b):
    return -(-a // b)


# ---------------------------------------------------------------------------
# Pallas kernel factory: fused shifted-matmul conv + bias + SiLU
# ---------------------------------------------------------------------------
def _make_conv_kernel(offsets, tm, cout_p, cin_p):
    n_taps = len(offsets)

    def kernel(xa_ref, xb_ref, w_ref, bias_ref, o_ref):
        # xa_ref / xb_ref: (1, cin_p, tm) bf16  — M-blocks mb and mb+1 (halo).
        # w_ref:   (n_taps, cout_p, cin_p) bf16 — VMEM-resident folded weight.
        # bias_ref:(cout_p, 1) f32              — folded BN bias.
        # o_ref:   (1, cout_p, tm) bf16          — lane-dense output tile.
        x_cat = jnp.concatenate([xa_ref[0], xb_ref[0]], axis=-1)  # (cin_p, 2*tm)
        acc = jnp.zeros((cout_p, tm), jnp.float32)
        for t in range(n_taps):
            off = offsets[t]
            x_tap = x_cat[:, off:off + tm]            # static lane-offset slice
            acc = acc + jnp.dot(w_ref[t], x_tap,
                                preferred_element_type=jnp.float32)  # MXU
        y = acc + bias_ref[...]                       # f32 epilogue (VPU)
        o_ref[0] = (y * jax.nn.sigmoid(y)).astype(o_ref.dtype)       # SiLU (EUP)

    return kernel


# ---------------------------------------------------------------------------
# Public wrapper: Conv2d(bias=False) + BatchNorm2d(eval) + SiLU
# ---------------------------------------------------------------------------
@functools.partial(jax.jit, static_argnames=("stride", "padding"))
def cnn_block_forward(x_nchw, conv_w, gamma, beta, run_mean, run_var,
                      stride=1, padding=1, eps=1e-5):
    """x_nchw: (B, C_in, H, W), conv_w: (C_out, C_in, KH, KW) -> NCHW bf16 out.

    Operands are bf16 on the MXU; accumulation / bias / SiLU in f32.
    """
    b, c_in, h, w = x_nchw.shape
    c_out, c_in_w, kh, kw = conv_w.shape
    assert c_in == c_in_w, (c_in, c_in_w)

    hp, wp = h + 2 * padding, w + 2 * padding
    h_dense = hp - kh + 1                       # stride-1 output rows
    h_out = (hp - kh) // stride + 1
    w_out = (wp - kw) // stride + 1
    m_dense = h_dense * wp                      # dense output pixels (padded-width grid)

    # ---- input: NCHW bf16, spatial zero-pad, flatten spatial. No transpose.
    cin_p = _round_up(max(c_in, 1), 16)         # bf16 sublane-friendly
    xq = x_nchw.astype(jnp.bfloat16)            # cast before any layout copy
    x_pad = jnp.pad(xq, ((0, 0), (0, cin_p - c_in),
                         (padding, padding), (padding, padding)))
    x_flat = x_pad.reshape(b, cin_p, hp * wp)

    # ---- tile sizes (lane-dense, >= halo so two consecutive blocks suffice).
    halo = (kh - 1) * wp + (kw - 1)
    tm = min(512, _round_up(m_dense, 128))
    tm = max(tm, _round_up(max(halo, 1), 128))
    n_m_blocks = _cdiv(m_dense, tm)
    m_in_pad = (n_m_blocks + 1) * tm            # +1 block so the "next block" spec is valid
    x_flat = jnp.pad(x_flat, ((0, 0), (0, 0), (0, m_in_pad - hp * wp)))

    # ---- fold BatchNorm (inference) into weight scale + bias.
    scale = (gamma / jnp.sqrt(run_var + eps)).astype(jnp.float32)
    bias = (beta - run_mean * scale).astype(jnp.float32)
    cout_p = _round_up(max(c_out, 1), 16)
    w_taps = jnp.transpose(
        conv_w.astype(jnp.float32) * scale[:, None, None, None],
        (2, 3, 0, 1)).reshape(kh * kw, c_out, c_in)
    w_taps = jnp.pad(w_taps, ((0, 0), (0, cout_p - c_out), (0, cin_p - c_in)))
    w_taps = w_taps.astype(jnp.bfloat16)
    bias_p = jnp.pad(bias, (0, cout_p - c_out)).reshape(cout_p, 1)

    offsets = tuple(i * wp + j for i in range(kh) for j in range(kw))
    m_out_pad = n_m_blocks * tm

    kernel = _make_conv_kernel(offsets, tm, cout_p, cin_p)

    cost = pl.CostEstimate(
        flops=2 * b * m_out_pad * cout_p * cin_p * len(offsets),
        transcendentals=b * cout_p * m_out_pad,
        bytes_accessed=(2 * b * cin_p * m_in_pad * 2        # activations read ~2x (halo)
                        + len(offsets) * cout_p * cin_p * 2  # resident weight, once
                        + cout_p * 4                         # bias
                        + b * cout_p * m_out_pad * 2),       # bf16 output
    )

    out_flat = pl.pallas_call(
        kernel,
        out_shape=jax.ShapeDtypeStruct((b, cout_p, m_out_pad), jnp.bfloat16),
        grid_spec=pltpu.PrefetchScalarGridSpec(
            num_scalar_prefetch=0,
            grid=(b, n_m_blocks),
            in_specs=[
                pl.BlockSpec((1, cin_p, tm), lambda bi, mi: (bi, 0, mi)),
                pl.BlockSpec((1, cin_p, tm), lambda bi, mi: (bi, 0, mi + 1)),
                pl.BlockSpec((kh * kw, cout_p, cin_p), lambda bi, mi: (0, 0, 0)),
                pl.BlockSpec((cout_p, 1), lambda bi, mi: (0, 0)),
            ],
            out_specs=pl.BlockSpec((1, cout_p, tm), lambda bi, mi: (bi, 0, mi)),
        ),
        compiler_params=pltpu.CompilerParams(
            dimension_semantics=("parallel", "parallel")),
        cost_estimate=cost,
    )(x_flat, x_flat, w_taps, bias_p)

    # ---- strip padding; output is already NCHW (dense stride-1 grid -> subsample).
    dense = out_flat[:, :c_out, :m_dense].reshape(b, c_out, h_dense, wp)
    out = dense[:, :, ::stride, ::stride][:, :, :h_out, :w_out]
    return out


# ---------------------------------------------------------------------------
# Reference (same bf16 operand quantization as the kernel, f32 math after)
# ---------------------------------------------------------------------------
def _reference(x_nchw, conv_w, gamma, beta, run_mean, run_var,
               stride=1, padding=1, eps=1e-5):
    scale = gamma / jnp.sqrt(run_var + eps)
    bias = beta - run_mean * scale
    w_scaled = conv_w.astype(jnp.float32) * scale[:, None, None, None]
    xq = x_nchw.astype(jnp.bfloat16).astype(jnp.float32)
    wq = w_scaled.astype(jnp.bfloat16).astype(jnp.float32)
    y = jax.lax.conv_general_dilated(
        xq, wq,
        window_strides=(stride, stride),
        padding=((padding, padding), (padding, padding)),
        dimension_numbers=("NCHW", "OIHW", "NCHW"),
    )
    y = y + bias[None, :, None, None]
    return y * jax.nn.sigmoid(y)


if __name__ == "__main__":
    key = jax.random.PRNGKey(0)
    k_x, k_w, k_g, k_b, k_m, k_v = jax.random.split(key, 6)

    B, C_IN, H, W = 2, 4, 16, 16
    C_OUT, KS, STRIDE, PAD = 8, 3, 1, 1

    x = jax.random.normal(k_x, (B, C_IN, H, W), dtype=jnp.float32)
    conv_w = 0.1 * jax.random.normal(k_w, (C_OUT, C_IN, KS, KS), jnp.float32)
    gamma = 1.0 + 0.1 * jax.random.normal(k_g, (C_OUT,), jnp.float32)
    beta = 0.1 * jax.random.normal(k_b, (C_OUT,), jnp.float32)
    run_mean = 0.1 * jax.random.normal(k_m, (C_OUT,), jnp.float32)
    run_var = jnp.abs(1.0 + 0.1 * jax.random.normal(k_v, (C_OUT,), jnp.float32))

    out = cnn_block_forward(x, conv_w, gamma, beta, run_mean, run_var,
                            stride=STRIDE, padding=PAD)
    out = jax.block_until_ready(out)

    ref = _reference(x, conv_w, gamma, beta, run_mean, run_var,
                     stride=STRIDE, padding=PAD)
    assert out.shape == (B, C_OUT, H, W), out.shape
    err = float(jnp.max(jnp.abs(out.astype(jnp.float32) - ref)))
    assert err < 2e-2, err    # bf16 output quantization bounds the error

    print("KERNEL_OK")
</pallas_src>

<mosaic_0001>
module attributes {stable_mosaic.version = 11 : i64} {
  func.func @kernel(%arg0: i32, %arg1: i32, %arg2: memref<1x16x384xbf16, #tpu.memory_space<vmem>>, %arg3: memref<1x16x384xbf16, #tpu.memory_space<vmem>>, %arg4: memref<9x16x16xbf16, #tpu.memory_space<vmem>>, %arg5: memref<16x1xf32, #tpu.memory_space<vmem>>, %arg6: memref<1x16x384xbf16, #tpu.memory_space<vmem>>) attributes {dimension_semantics = [#tpu.dimension_semantics<parallel>, #tpu.dimension_semantics<parallel>], iteration_bounds = array<i64: 2, 1>, scalar_prefetch = 0 : i64, scratch_operands = 0 : i64, tpu.core_type = #tpu.core_type<tc>, window_params = [{transform_indices = @transform_0, window_bounds = array<i64: 1, 16, 384>}, {transform_indices = @transform_1, window_bounds = array<i64: 1, 16, 384>}, {pipeline_mode = #tpu.pipeline_mode<synchronous>, transform_indices = @transform_2, window_bounds = array<i64: 9, 16, 16>}, {pipeline_mode = #tpu.pipeline_mode<synchronous>, transform_indices = @transform_3, window_bounds = array<i64: 16, 1>}, {transform_indices = @transform_4, window_bounds = array<i64: 1, 16, 384>}]} {
    %c0 = arith.constant 0 : index
    %c0_0 = arith.constant 0 : index
    %c0_1 = arith.constant 0 : index
    %0 = vector.load %arg2[%c0, %c0_0, %c0_1] : memref<1x16x384xbf16, #tpu.memory_space<vmem>>, vector<1x16x384xbf16>
    %1 = vector.shape_cast %0 : vector<1x16x384xbf16> to vector<16x384xbf16>
    %c0_2 = arith.constant 0 : index
    %c0_3 = arith.constant 0 : index
    %c0_4 = arith.constant 0 : index
    %2 = vector.load %arg3[%c0_2, %c0_3, %c0_4] : memref<1x16x384xbf16, #tpu.memory_space<vmem>>, vector<1x16x384xbf16>
    %3 = vector.shape_cast %2 : vector<1x16x384xbf16> to vector<16x384xbf16>
    %4 = tpu.concatenate %1, %3 in 1 : vector<16x384xbf16>, vector<16x384xbf16> -> vector<16x768xbf16>
    %cst = arith.constant 0.000000e+00 : f32
    %5 = vector.broadcast %cst : f32 to vector<16x384xf32>
    %6 = vector.extract_strided_slice %4 {offsets = [0, 0], sizes = [16, 384], strides = [1, 1]} : vector<16x768xbf16> to vector<16x384xbf16>
    %c0_5 = arith.constant 0 : index
    %c0_6 = arith.constant 0 : index
    %c0_7 = arith.constant 0 : index
    %7 = vector.load %arg4[%c0_5, %c0_6, %c0_7] : memref<9x16x16xbf16, #tpu.memory_space<vmem>>, vector<1x16x16xbf16>
    %8 = vector.shape_cast %7 : vector<1x16x16xbf16> to vector<16x16xbf16>
    %cst_8 = arith.constant dense<0.000000e+00> : vector<16x384xf32>
    %9 = tpu.matmul %8, %6, %cst_8 {dimension_numbers = #tpu.dot_dimension_numbers<[1], [0], [0], [1], [0, 0, 1, 1], [], []>} : vector<16x16xbf16>, vector<16x384xbf16>, vector<16x384xf32> -> vector<16x384xf32>
    %10 = arith.addf %5, %9 : vector<16x384xf32>
    %11 = vector.extract_strided_slice %4 {offsets = [0, 1], sizes = [16, 384], strides = [1, 1]} : vector<16x768xbf16> to vector<16x384xbf16>
    %c1 = arith.constant 1 : index
    %c0_9 = arith.constant 0 : index
    %c0_10 = arith.constant 0 : index
    %12 = vector.load %arg4[%c1, %c0_9, %c0_10] : memref<9x16x16xbf16, #tpu.memory_space<vmem>>, vector<1x16x16xbf16>
    %13 = vector.shape_cast %12 : vector<1x16x16xbf16> to vector<16x16xbf16>
    %cst_11 = arith.constant dense<0.000000e+00> : vector<16x384xf32>
    %14 = tpu.matmul %13, %11, %cst_11 {dimension_numbers = #tpu.dot_dimension_numbers<[1], [0], [0], [1], [0, 0, 1, 1], [], []>} : vector<16x16xbf16>, vector<16x384xbf16>, vector<16x384xf32> -> vector<16x384xf32>
    %15 = arith.addf %10, %14 : vector<16x384xf32>
    %16 = vector.extract_strided_slice %4 {offsets = [0, 2], sizes = [16, 384], strides = [1, 1]} : vector<16x768xbf16> to vector<16x384xbf16>
    %c2 = arith.constant 2 : index
    %c0_12 = arith.constant 0 : index
    %c0_13 = arith.constant 0 : index
    %17 = vector.load %arg4[%c2, %c0_12, %c0_13] : memref<9x16x16xbf16, #tpu.memory_space<vmem>>, vector<1x16x16xbf16>
    %18 = vector.shape_cast %17 : vector<1x16x16xbf16> to vector<16x16xbf16>
    %cst_14 = arith.constant dense<0.000000e+00> : vector<16x384xf32>
    %19 = tpu.matmul %18, %16, %cst_14 {dimension_numbers = #tpu.dot_dimension_numbers<[1], [0], [0], [1], [0, 0, 1, 1], [], []>} : vector<16x16xbf16>, vector<16x384xbf16>, vector<16x384xf32> -> vector<16x384xf32>
    %20 = arith.addf %15, %19 : vector<16x384xf32>
    %21 = vector.extract_strided_slice %4 {offsets = [0, 18], sizes = [16, 384], strides = [1, 1]} : vector<16x768xbf16> to vector<16x384xbf16>
    %c3 = arith.constant 3 : index
    %c0_15 = arith.constant 0 : index
    %c0_16 = arith.constant 0 : index
    %22 = vector.load %arg4[%c3, %c0_15, %c0_16] : memref<9x16x16xbf16, #tpu.memory_space<vmem>>, vector<1x16x16xbf16>
    %23 = vector.shape_cast %22 : vector<1x16x16xbf16> to vector<16x16xbf16>
    %cst_17 = arith.constant dense<0.000000e+00> : vector<16x384xf32>
    %24 = tpu.matmul %23, %21, %cst_17 {dimension_numbers = #tpu.dot_dimension_numbers<[1], [0], [0], [1], [0, 0, 1, 1], [], []>} : vector<16x16xbf16>, vector<16x384xbf16>, vector<16x384xf32> -> vector<16x384xf32>
    %25 = arith.addf %20, %24 : vector<16x384xf32>
    %26 = vector.extract_strided_slice %4 {offsets = [0, 19], sizes = [16, 384], strides = [1, 1]} : vector<16x768xbf16> to vector<16x384xbf16>
    %c4 = arith.constant 4 : index
    %c0_18 = arith.constant 0 : index
    %c0_19 = arith.constant 0 : index
    %27 = vector.load %arg4[%c4, %c0_18, %c0_19] : memref<9x16x16xbf16, #tpu.memory_space<vmem>>, vector<1x16x16xbf16>
    %28 = vector.shape_cast %27 : vector<1x16x16xbf16> to vector<16x16xbf16>
    %cst_20 = arith.constant dense<0.000000e+00> : vector<16x384xf32>
    %29 = tpu.matmul %28, %26, %cst_20 {dimension_numbers = #tpu.dot_dimension_numbers<[1], [0], [0], [1], [0, 0, 1, 1], [], []>} : vector<16x16xbf16>, vector<16x384xbf16>, vector<16x384xf32> -> vector<16x384xf32>
    %30 = arith.addf %25, %29 : vector<16x384xf32>
    %31 = vector.extract_strided_slice %4 {offsets = [0, 20], sizes = [16, 384], strides = [1, 1]} : vector<16x768xbf16> to vector<16x384xbf16>
    %c5 = arith.constant 5 : index
    %c0_21 = arith.constant 0 : index
    %c0_22 = arith.constant 0 : index
    %32 = vector.load %arg4[%c5, %c0_21, %c0_22] : memref<9x16x16xbf16, #tpu.memory_space<vmem>>, vector<1x16x16xbf16>
    %33 = vector.shape_cast %32 : vector<1x16x16xbf16> to vector<16x16xbf16>
    %cst_23 = arith.constant dense<0.000000e+00> : vector<16x384xf32>
    %34 = tpu.matmul %33, %31, %cst_23 {dimension_numbers = #tpu.dot_dimension_numbers<[1], [0], [0], [1], [0, 0, 1, 1], [], []>} : vector<16x16xbf16>, vector<16x384xbf16>, vector<16x384xf32> -> vector<16x384xf32>
    %35 = arith.addf %30, %34 : vector<16x384xf32>
    %36 = vector.extract_strided_slice %4 {offsets = [0, 36], sizes = [16, 384], strides = [1, 1]} : vector<16x768xbf16> to vector<16x384xbf16>
    %c6 = arith.constant 6 : index
    %c0_24 = arith.constant 0 : index
    %c0_25 = arith.constant 0 : index
    %37 = vector.load %arg4[%c6, %c0_24, %c0_25] : memref<9x16x16xbf16, #tpu.memory_space<vmem>>, vector<1x16x16xbf16>
    %38 = vector.shape_cast %37 : vector<1x16x16xbf16> to vector<16x16xbf16>
    %cst_26 = arith.constant dense<0.000000e+00> : vector<16x384xf32>
    %39 = tpu.matmul %38, %36, %cst_26 {dimension_numbers = #tpu.dot_dimension_numbers<[1], [0], [0], [1], [0, 0, 1, 1], [], []>} : vector<16x16xbf16>, vector<16x384xbf16>, vector<16x384xf32> -> vector<16x384xf32>
    %40 = arith.addf %35, %39 : vector<16x384xf32>
    %41 = vector.extract_strided_slice %4 {offsets = [0, 37], sizes = [16, 384], strides = [1, 1]} : vector<16x768xbf16> to vector<16x384xbf16>
    %c7 = arith.constant 7 : index
    %c0_27 = arith.constant 0 : index
    %c0_28 = arith.constant 0 : index
    %42 = vector.load %arg4[%c7, %c0_27, %c0_28] : memref<9x16x16xbf16, #tpu.memory_space<vmem>>, vector<1x16x16xbf16>
    %43 = vector.shape_cast %42 : vector<1x16x16xbf16> to vector<16x16xbf16>
    %cst_29 = arith.constant dense<0.000000e+00> : vector<16x384xf32>
    %44 = tpu.matmul %43, %41, %cst_29 {dimension_numbers = #tpu.dot_dimension_numbers<[1], [0], [0], [1], [0, 0, 1, 1], [], []>} : vector<16x16xbf16>, vector<16x384xbf16>, vector<16x384xf32> -> vector<16x384xf32>
    %45 = arith.addf %40, %44 : vector<16x384xf32>
    %46 = vector.extract_strided_slice %4 {offsets = [0, 38], sizes = [16, 384], strides = [1, 1]} : vector<16x768xbf16> to vector<16x384xbf16>
    %c8 = arith.constant 8 : index
    %c0_30 = arith.constant 0 : index
    %c0_31 = arith.constant 0 : index
    %47 = vector.load %arg4[%c8, %c0_30, %c0_31] : memref<9x16x16xbf16, #tpu.memory_space<vmem>>, vector<1x16x16xbf16>
    %48 = vector.shape_cast %47 : vector<1x16x16xbf16> to vector<16x16xbf16>
    %cst_32 = arith.constant dense<0.000000e+00> : vector<16x384xf32>
    %49 = tpu.matmul %48, %46, %cst_32 {dimension_numbers = #tpu.dot_dimension_numbers<[1], [0], [0], [1], [0, 0, 1, 1], [], []>} : vector<16x16xbf16>, vector<16x384xbf16>, vector<16x384xf32> -> vector<16x384xf32>
    %50 = arith.addf %45, %49 : vector<16x384xf32>
    %c0_33 = arith.constant 0 : index
    %c0_34 = arith.constant 0 : index
    %51 = vector.load %arg5[%c0_33, %c0_34] : memref<16x1xf32, #tpu.memory_space<vmem>>, vector<16x1xf32>
    %52 = vector.broadcast %51 : vector<16x1xf32> to vector<16x384xf32>
    %53 = arith.addf %50, %52 : vector<16x384xf32>
    %54 = arith.negf %53 : vector<16x384xf32>
    %55 = math.exp %54 : vector<16x384xf32>
    %cst_35 = arith.constant 1.000000e+00 : f32
    %56 = vector.broadcast %cst_35 : f32 to vector<16x384xf32>
    %57 = arith.addf %56, %55 : vector<16x384xf32>
    %58 = arith.divf %56, %57 : vector<16x384xf32>
    %59 = arith.mulf %53, %58 : vector<16x384xf32>
    %60 = arith.truncf %59 : vector<16x384xf32> to vector<16x384xbf16>
    %c0_36 = arith.constant 0 : index
    %c0_37 = arith.constant 0 : index
    %c0_38 = arith.constant 0 : index
    %61 = vector.load %arg6[%c0_36, %c0_37, %c0_38] : memref<1x16x384xbf16, #tpu.memory_space<vmem>>, vector<1x16x384xbf16>
    %62 = vector.shape_cast %61 : vector<1x16x384xbf16> to vector<16x384xbf16>
    %63 = vector.shape_cast %60 : vector<16x384xbf16> to vector<1x16x384xbf16>
    tpu.vector_store %arg6[%c0_36, %c0_37, %c0_38], %63 {strides = array<i32>} : memref<1x16x384xbf16, #tpu.memory_space<vmem>>, vector<1x16x384xbf16>,
    return
  }
  func.func @transform_0(%arg0: i32, %arg1: i32) -> (i32, i32, i32) {
    %c0_i32 = arith.constant 0 : i32
    %c0_i32_0 = arith.constant 0 : i32
    return %arg0, %c0_i32, %arg1 : i32, i32, i32
  }
  func.func @transform_1(%arg0: i32, %arg1: i32) -> (i32, i32, i32) {
    %c1_i32 = arith.constant 1 : i32
    %0 = arith.addi %arg1, %c1_i32 : i32
    %c0_i32 = arith.constant 0 : i32
    %c0_i32_0 = arith.constant 0 : i32
    return %arg0, %c0_i32, %0 : i32, i32, i32
  }
  func.func @transform_2(%arg0: i32, %arg1: i32) -> (i32, i32, i32) {
    %c0_i32 = arith.constant 0 : i32
    %c0_i32_0 = arith.constant 0 : i32
    %c0_i32_1 = arith.constant 0 : i32
    %c0_i32_2 = arith.constant 0 : i32
    return %c0_i32, %c0_i32_0, %c0_i32_1 : i32, i32, i32
  }
  func.func @transform_3(%arg0: i32, %arg1: i32) -> (i32, i32) {
    %c0_i32 = arith.constant 0 : i32
    %c0_i32_0 = arith.constant 0 : i32
    %c0_i32_1 = arith.constant 0 : i32
    return %c0_i32, %c0_i32_0 : i32, i32
  }
  func.func @transform_4(%arg0: i32, %arg1: i32) -> (i32, i32, i32) {
    %c0_i32 = arith.constant 0 : i32
    %c0_i32_0 = arith.constant 0 : i32
    return %arg0, %c0_i32, %arg1 : i32, i32, i32
  }
}

</mosaic_0001>

<llo_original>
// kernel: cnn_block_forward.1
$region0: #{cnn_block_forward.1}
  #allocation0 [shape = 'u32[]', space=smem, size = 0x4, offset = 0x4, fixed_abs, tag = 'smem constant byte address 0x4 - core index']
  #allocation1 [shape = 'u32[144,128]{1,0:T(1,128)}', space=vmem, size = 0x12000, scoped, tag = 'internal scratch']
  %s0 = inlined_call_operand.vmem [shape: bf16[2,16,768], index: 0, kind: input, shape index: {}, may-alias: {0,1}]
  %s1 = inlined_call_operand.vmem [shape: bf16[2,16,768], index: 1, kind: input, shape index: {}, may-alias: {0,1}]
  %s2 = inlined_call_operand.vmem [shape: bf16[9,16,16], index: 2, kind: input, shape index: {}]
  %s3 = inlined_call_operand.vmem [shape: f32[16,1], index: 3, kind: input, shape index: {}]
  %s4 = inlined_call_operand.vmem [shape: bf16[2,16,384], index: 4, kind: output, shape index: {}]
  %s5 = sld [smem:[#allocation0]]
  $region101: #{cnn_block_forward.1} parent=0
    _
  %s7 = ssub.s32 1, %s5
  %s8 = scalar_select 0, %s7, %s5
  $region1: #{cnn_block_forward.1} parent=0
    #allocation2 [shape = 'u8[24576]{0}', space=vmem, size = 0x6000, scoped, tag = 'input window, operand 0']
    #allocation3 [shape = 'u8[24576]{0}', space=vmem, size = 0x6000, scoped, tag = 'input window, operand 1']
    loop: start=0, step=1, limit=4
    $region2: #{cnn_block_forward.1} parent=1 // loop_pre_header
      _
    $region3: #{cnn_block_forward.1} parent=1 // loop_header
      %s10 = sphi 0, %s14
      %p11 = scmp.ge.s32.totalorder %s10, 4
      %s17 = sphi 0, %s29
      %s18 = sphi 0, %s25
      %s19 = sphi 0, %s17
      %s20 = sphi 0, %s18
      %s21 = sphi 0, %s19
      %s22 = sphi 0, %s20
      %s34 = sphi 0, %s36
      %s37 = sphi 0, %s34
      %s38 = sphi 0, %s37
      %s54 = sphi 0, %s38
      %s64 = sphi 0, %s66
      %s67 = sphi 0, %s64
      %s68 = sphi 0, %s67
      %s84 = sphi 0, %s68
      %s88 = sphi 0, %s88
      %s90 = sphi 0, %s88
      %s91 = sphi 0, %s90
      %s105 = sphi 0, %s91
      %s109 = sphi 0, %s109
      %s111 = sphi 0, %s109
      %s112 = sphi 0, %s111
      %s126 = sphi 0, %s112
      %s134 = sphi 0, %s136
      %s137 = sphi 0, %s134
      %s138 = sphi 0, %s137
      %s154 = sphi 0, %s138
    $region4: #{cnn_block_forward.1} parent=1 // loop_header_branch
      %13 = sbr.rel (%p11) target = $region8
    $region5: #{cnn_block_forward.1} parent=1 // loop_body
      %s15 = ssub.s32 %s10, 1
      %s16 = ssub.s32 %s10, 2
      %s23 = sadd.s32 1, %s18
      %p24 = scmp.ge.s32.totalorder %s23, 1
      %s25 = scalar_select %p24, 0, %s23
      %s26 = sadd.s32 1, %s17
      %s27 = scalar_select %p24, %s26, %s17
      %p28 = scmp.ge.s32.totalorder %s27, 2
      %s29 = scalar_select %p28, 0, %s27
      %s30 = ssub.s32 %s17, %s29
      %s31 = ssub.s32 %s18, %s25
      %s32 = sor.u32 %s30, %s31
      %p33 = scmp.eq.s32.totalorder %s32, 0
      %s35 = sadd.s32 %s34, 1
      %s36 = scalar_select %p33, %s34, %s35
      %p39 = pneg %p33
      %p40 = scmp.eq.s32.totalorder %s10, 1
      %p41 = por %p39, %p40
      %p42 = scmp.ne.s32.totalorder %s34, %s37
      %p43 = scmp.eq.s32.totalorder %s10, 0
      %p44 = por %p42, %p43
      %p45 = scmp.ne.s32.totalorder %s34, %s37
      %p46 = scmp.eq.s32.totalorder %s15, 1
      %p47 = por %p45, %p46
      %p48 = scmp.ne.s32.totalorder %s37, %s38
      %p49 = scmp.eq.s32.totalorder %s15, 0
      %p50 = por %p48, %p49
      %p51 = scmp.ne.s32.totalorder %s37, %s38
      %p52 = scmp.eq.s32.totalorder %s16, 1
      %p53 = por %p51, %p52
      %p55 = scmp.ne.s32.totalorder %s38, %s54
      %p56 = scmp.eq.s32.totalorder %s16, 0
      %p57 = por %p55, %p56
      %s58 = sadd.s32 %s18, 1
      %s59 = sadd.s32 %s25, 1
      %s60 = ssub.s32 %s17, %s29
      %s61 = ssub.s32 %s58, %s59
      %s62 = sor.u32 %s60, %s61
      %p63 = scmp.eq.s32.totalorder %s62, 0
      %s65 = sadd.s32 %s64, 1
      %s66 = scalar_select %p63, %s64, %s65
      %p69 = pneg %p63
      %p70 = scmp.eq.s32.totalorder %s10, 1
      %p71 = por %p69, %p70
      %p72 = scmp.ne.s32.totalorder %s64, %s67
      %p73 = scmp.eq.s32.totalorder %s10, 0
      %p74 = por %p72, %p73
      %p75 = scmp.ne.s32.totalorder %s64, %s67
      %p76 = scmp.eq.s32.totalorder %s15, 1
      %p77 = por %p75, %p76
      %p78 = scmp.ne.s32.totalorder %s67, %s68
      %p79 = scmp.eq.s32.totalorder %s15, 0
      %p80 = por %p78, %p79
      %p81 = scmp.ne.s32.totalorder %s67, %s68
      %p82 = scmp.eq.s32.totalorder %s16, 1
      %p83 = por %p81, %p82
      %p85 = scmp.ne.s32.totalorder %s68, %s84
      %p86 = scmp.eq.s32.totalorder %s16, 0
      %p87 = por %p85, %p86
      %s89 = sadd.s32 %s88, 1
      %p92 = scmp.eq.s32.totalorder %s10, 1
      %p93 = scmp.ne.s32.totalorder %s88, %s90
      %p94 = scmp.eq.s32.totalorder %s10, 0
      %p95 = por %p93, %p94
      %p96 = scmp.ne.s32.totalorder %s88, %s90
      %p97 = scmp.eq.s32.totalorder %s15, 1
      %p98 = por %p96, %p97
      %p99 = scmp.ne.s32.totalorder %s90, %s91
      %p100 = scmp.eq.s32.totalorder %s15, 0
      %p101 = por %p99, %p100
      %p102 = scmp.ne.s32.totalorder %s90, %s91
      %p103 = scmp.eq.s32.totalorder %s16, 1
      %p104 = por %p102, %p103
      %p106 = scmp.ne.s32.totalorder %s91, %s105
      %p107 = scmp.eq.s32.totalorder %s16, 0
      %p108 = por %p106, %p107
      %s110 = sadd.s32 %s109, 1
      %p113 = scmp.eq.s32.totalorder %s10, 1
      %p114 = scmp.ne.s32.totalorder %s109, %s111
      %p115 = scmp.eq.s32.totalorder %s10, 0
      %p116 = por %p114, %p115
      %p117 = scmp.ne.s32.totalorder %s109, %s111
      %p118 = scmp.eq.s32.totalorder %s15, 1
      %p119 = por %p117, %p118
      %p120 = scmp.ne.s32.totalorder %s111, %s112
      %p121 = scmp.eq.s32.totalorder %s15, 0
      %p122 = por %p120, %p121
      %p123 = scmp.ne.s32.totalorder %s111, %s112
      %p124 = scmp.eq.s32.totalorder %s16, 1
      %p125 = por %p123, %p124
      %p127 = scmp.ne.s32.totalorder %s112, %s126
      %p128 = scmp.eq.s32.totalorder %s16, 0
      %p129 = por %p127, %p128
      %s130 = ssub.s32 %s17, %s29
      %s131 = ssub.s32 %s18, %s25
      %s132 = sor.u32 %s130, %s131
      %p133 = scmp.eq.s32.totalorder %s132, 0
      %s135 = sadd.s32 %s134, 1
      %s136 = scalar_select %p133, %s134, %s135
      %p139 = pneg %p133
      %p140 = scmp.eq.s32.totalorder %s10, 1
      %p141 = por %p139, %p140
      %p142 = scmp.ne.s32.totalorder %s134, %s137
      %p143 = scmp.eq.s32.totalorder %s10, 0
      %p144 = por %p142, %p143
      %p145 = scmp.ne.s32.totalorder %s134, %s137
      %p146 = scmp.eq.s32.totalorder %s15, 1
      %p147 = por %p145, %p146
      %p148 = scmp.ne.s32.totalorder %s137, %s138
      %p149 = scmp.eq.s32.totalorder %s15, 0
      %p150 = por %p148, %p149
      %p151 = scmp.ne.s32.totalorder %s137, %s138
      %p152 = scmp.eq.s32.totalorder %s16, 1
      %p153 = por %p151, %p152
      %p155 = scmp.ne.s32.totalorder %s138, %s154
      %p156 = scmp.eq.s32.totalorder %s16, 0
      %p157 = por %p155, %p156
      %p158 = scmp.le.s32.totalorder 1, %s10
      %p159 = scmp.lt.s32.totalorder %s10, 3
      %p160 = pnand %p158, %p159
      %p161 = pneg %p160
      // Predicated region
      $region9: #{cnn_block_forward.1} parent=5 // pred_check
        _
      $region10: #{cnn_block_forward.1} parent=5 // pred_check_branch
        %163 = sbr.rel (%p160) target = $region12
      $region11: #{cnn_block_forward.1} parent=5 // pred_region
        %s164 = ssub.s32 %s10, 1
        // Predicated region
        $region13: #{cnn_block_forward.1} parent=11 // pred_check
          %p165 = pneg %p101
        $region14: #{cnn_block_forward.1} parent=11 // pred_check_branch
          %167 = sbr.rel (%p165) target = $region16
        $region15: #{cnn_block_forward.1} parent=11 // pred_region
          _
        $region16: #{cnn_block_forward.1} parent=11 // pred_fallthru
          _
        // Predicated region
        $region17: #{cnn_block_forward.1} parent=11 // pred_check
          %p168 = pneg %p122
        $region18: #{cnn_block_forward.1} parent=11 // pred_check_branch
          %170 = sbr.rel (%p168) target = $region20
        $region19: #{cnn_block_forward.1} parent=11 // pred_region
          _
        $region20: #{cnn_block_forward.1} parent=11 // pred_fallthru
          _
      $region12: #{cnn_block_forward.1} parent=5 // pred_fallthru
        _
      %p171 = scmp.lt.s32.totalorder %s10, 2
      // Predicated region
      $region21: #{cnn_block_forward.1} parent=5 // pred_check
        %p172 = pneg %p171
      $region22: #{cnn_block_forward.1} parent=5 // pred_check_branch
        %174 = sbr.rel (%p172) target = $region24
      $region23: #{cnn_block_forward.1} parent=5 // pred_region
        // Predicated region
        $region25: #{cnn_block_forward.1} parent=23 // pred_check
          %p175 = pneg %p44
        $region26: #{cnn_block_forward.1} parent=23 // pred_check_branch
          %177 = sbr.rel (%p175) target = $region28
        $region27: #{cnn_block_forward.1} parent=23 // pred_region
          %s178 = sand.u32 %s34, 1
          %s179 = sand.u32 %s34, 1
          %s180 = smul.addr %s179, 24
          %s181 = scalar_lea.vmem [#allocation2], %s180
          %s182 = smul.u32 3, %s18
          %s183 = smul.addr %s17, 12
          %s184 = sadd.s32 %s182, %s183
          %s185 = smul.addr %s184, 4
          %s186 = scalar_lea.vmem %s0, %s185
          // Predicated region
          $region29: #{cnn_block_forward.1} parent=27 // pred_check
            _
          $region30: #{cnn_block_forward.1} parent=27 // pred_check_branch
            %188 = sbr.rel (0) target = $region32
          $region31: #{cnn_block_forward.1} parent=27 // pred_region
            // Predicated region
            $region33: #{cnn_block_forward.1} parent=31 // pred_check
              _
            $region34: #{cnn_block_forward.1} parent=31 // pred_check_branch
              %190 = sbr.rel (0) target = $region36
            $region35: #{cnn_block_forward.1} parent=31 // pred_region
              %s191 = scalar_lea.vmem %s186, 8
              %s192 = scalar_lea.vmem %s181, 8 [#allocation2]
              loop: start=0, step=1, limit=1
              $region37: #{cnn_block_forward.1} parent=35 // loop_pre_header
                _
              $region38: #{cnn_block_forward.1} parent=35 // loop_header
                %s194 = sphi 0, %s198
                %p195 = scmp.ge.s32.totalorder %s194, 1
                %s199 = sphi %s186, %s186
                %s200 = sphi %s181, %s181
              $region39: #{cnn_block_forward.1} parent=35 // loop_header_branch
                %197 = sbr.rel (%p195) target = $region43
              $region40: #{cnn_block_forward.1} parent=35 // loop_body
                %v201 = vld [vmem:[%s199] sm:$0xff]
                %202 = vst [vmem:[%s200] sm:$0xff] %v201
                %v203 = vld [vmem:[%s199 + $0x18] sm:$0xff]
                %204 = vst [vmem:[%s200 + $0xc] sm:$0xff] %v203
              $region41: #{cnn_block_forward.1} parent=35 // loop_footer
                %s198 = sadd.s32 1, %s194
              $region42: #{cnn_block_forward.1} parent=35 // loop_footer_branch
                %193 = sbr.rel target = $region38
              $region43: #{cnn_block_forward.1} parent=35 // loop_exit
                _
              loop: start=0, step=1, limit=1
              $region44: #{cnn_block_forward.1} parent=35 // loop_pre_header
                _
              $region45: #{cnn_block_forward.1} parent=35 // loop_header
                %s207 = sphi 0, %s211
                %p208 = scmp.ge.s32.totalorder %s207, 1
                %s212 = sphi %s191, %s191
                %s213 = sphi %s192, %s192
              $region46: #{cnn_block_forward.1} parent=35 // loop_header_branch
                %210 = sbr.rel (%p208) target = $region50
              $region47: #{cnn_block_forward.1} parent=35 // loop_body
                %v214 = vld [vmem:[%s212] sm:$0xf]
                %215 = vst [vmem:[%s213] sm:$0xf] %v214
                %v216 = vld [vmem:[%s212 + $0x18] sm:$0xf]
                %217 = vst [vmem:[%s213 + $0xc] sm:$0xf] %v216
              $region48: #{cnn_block_forward.1} parent=35 // loop_footer
                %s211 = sadd.s32 1, %s207
              $region49: #{cnn_block_forward.1} parent=35 // loop_footer_branch
                %206 = sbr.rel target = $region45
              $region50: #{cnn_block_forward.1} parent=35 // loop_exit
                _
            $region36: #{cnn_block_forward.1} parent=31 // pred_fallthru
              _
          $region32: #{cnn_block_forward.1} parent=27 // pred_fallthru
            _
          %218 = vnop
        $region28: #{cnn_block_forward.1} parent=23 // pred_fallthru
          _
        // Predicated region
        $region51: #{cnn_block_forward.1} parent=23 // pred_check
          %p219 = pneg %p74
        $region52: #{cnn_block_forward.1} parent=23 // pred_check_branch
          %221 = sbr.rel (%p219) target = $region54
        $region53: #{cnn_block_forward.1} parent=23 // pred_region
          %s222 = sand.u32 %s64, 1
          %s223 = sand.u32 %s64, 1
          %s224 = smul.addr %s223, 24
          %s225 = scalar_lea.vmem [#allocation3], %s224
          %s226 = sadd.s32 %s18, 1
          %s227 = smul.u32 3, %s226
          %s228 = smul.addr %s17, 12
          %s229 = sadd.s32 %s227, %s228
          %s230 = smul.addr %s229, 4
          %s231 = scalar_lea.vmem %s1, %s230
          // Predicated region
          $region55: #{cnn_block_forward.1} parent=53 // pred_check
            _
          $region56: #{cnn_block_forward.1} parent=53 // pred_check_branch
            %233 = sbr.rel (0) target = $region58
          $region57: #{cnn_block_forward.1} parent=53 // pred_region
            // Predicated region
            $region59: #{cnn_block_forward.1} parent=57 // pred_check
              _
            $region60: #{cnn_block_forward.1} parent=57 // pred_check_branch
              %235 = sbr.rel (0) target = $region62
            $region61: #{cnn_block_forward.1} parent=57 // pred_region
              %s236 = scalar_lea.vmem %s231, 8
              %s237 = scalar_lea.vmem %s225, 8 [#allocation3]
              loop: start=0, step=1, limit=1
              $region63: #{cnn_block_forward.1} parent=61 // loop_pre_header
                _
              $region64: #{cnn_block_forward.1} parent=61 // loop_header
                %s239 = sphi 0, %s243
                %p240 = scmp.ge.s32.totalorder %s239, 1
                %s244 = sphi %s231, %s231
                %s245 = sphi %s225, %s225
              $region65: #{cnn_block_forward.1} parent=61 // loop_header_branch
                %242 = sbr.rel (%p240) target = $region69
              $region66: #{cnn_block_forward.1} parent=61 // loop_body
                %v246 = vld [vmem:[%s244] sm:$0xff]
                %247 = vst [vmem:[%s245] sm:$0xff] %v246
                %v248 = vld [vmem:[%s244 + $0x18] sm:$0xff]
                %249 = vst [vmem:[%s245 + $0xc] sm:$0xff] %v248
              $region67: #{cnn_block_forward.1} parent=61 // loop_footer
                %s243 = sadd.s32 1, %s239
              $region68: #{cnn_block_forward.1} parent=61 // loop_footer_branch
                %238 = sbr.rel target = $region64
              $region69: #{cnn_block_forward.1} parent=61 // loop_exit
                _
              loop: start=0, step=1, limit=1
              $region70: #{cnn_block_forward.1} parent=61 // loop_pre_header
                _
              $region71: #{cnn_block_forward.1} parent=61 // loop_header
                %s252 = sphi 0, %s256
                %p253 = scmp.ge.s32.totalorder %s252, 1
                %s257 = sphi %s236, %s236
                %s258 = sphi %s237, %s237
              $region72: #{cnn_block_forward.1} parent=61 // loop_header_branch
                %255 = sbr.rel (%p253) target = $region76
              $region73: #{cnn_block_forward.1} parent=61 // loop_body
                %v259 = vld [vmem:[%s257] sm:$0xf]
                %260 = vst [vmem:[%s258] sm:$0xf] %v259
                %v261 = vld [vmem:[%s257 + $0x18] sm:$0xf]
                %262 = vst [vmem:[%s258 + $0xc] sm:$0xf] %v261
              $region74: #{cnn_block_forward.1} parent=61 // loop_footer
                %s256 = sadd.s32 1, %s252
              $region75: #{cnn_block_forward.1} parent=61 // loop_footer_branch
                %251 = sbr.rel target = $region71
              $region76: #{cnn_block_forward.1} parent=61 // loop_exit
                _
            $region62: #{cnn_block_forward.1} parent=57 // pred_fallthru
              _
          $region58: #{cnn_block_forward.1} parent=53 // pred_fallthru
            _
          %263 = vnop
        $region54: #{cnn_block_forward.1} parent=23 // pred_fallthru
          _
      $region24: #{cnn_block_forward.1} parent=5 // pred_fallthru
        _
      %p264 = scmp.le.s32.totalorder 1, %s10
      %p265 = scmp.lt.s32.totalorder %s10, 3
      %p266 = pnand %p264, %p265
      %p267 = pneg %p266
      // Predicated region
      $region77: #{cnn_block_forward.1} parent=5 // pred_check
        _
      $region78: #{cnn_block_forward.1} parent=5 // pred_check_branch
        %269 = sbr.rel (%p266) target = $region80
      $region79: #{cnn_block_forward.1} parent=5 // pred_region
        %s270 = ssub.s32 %s10, 1
        %s271 = sand.u32 %s37, 1
        %s272 = sand.u32 %s37, 1
        %s273 = smul.addr %s272, 24
        %s274 = scalar_lea.vmem [#allocation2], %s273
        // Predicated region
        $region81: #{cnn_block_forward.1} parent=79 // pred_check
          %p275 = pneg %p50
        $region82: #{cnn_block_forward.1} parent=79 // pred_check_branch
          %277 = sbr.rel (%p275) target = $region84
        $region83: #{cnn_block_forward.1} parent=79 // pred_region
          _
        $region84: #{cnn_block_forward.1} parent=79 // pred_fallthru
          _
        %s278 = sand.u32 %s67, 1
        %s279 = sand.u32 %s67, 1
        %s280 = smul.addr %s279, 24
        %s281 = scalar_lea.vmem [#allocation3], %s280
        // Predicated region
        $region85: #{cnn_block_forward.1} parent=79 // pred_check
          %p282 = pneg %p80
        $region86: #{cnn_block_forward.1} parent=79 // pred_check_branch
          %284 = sbr.rel (%p282) target = $region88
        $region87: #{cnn_block_forward.1} parent=79 // pred_region
          _
        $region88: #{cnn_block_forward.1} parent=79 // pred_fallthru
          _
        %s285 = sand.u32 %s37, 1
        %s286 = sand.u32 %s37, 1
        %s287 = smul.addr %s286, 24
        %s288 = scalar_lea.vmem [#allocation2], %s287
        %p289 = pneg %p50
        %p290 = pneg %p47
        %s291 = sand.u32 %s67, 1
        %s292 = sand.u32 %s67, 1
        %s293 = smul.addr %s292, 24
        %s294 = scalar_lea.vmem [#allocation3], %s293
        %p295 = pneg %p80
        %p296 = pneg %p77
        %p297 = pneg %p101
        %p298 = pneg %p98
        %p299 = pneg %p122
        %p300 = pneg %p119
        %p301 = pneg %p150
        %p302 = pneg %p147
        %s303 = smul.u32 3, %s20
        %p304 = scmp.lt.s32.totalorder %s19, 1
        %s305 = scalar_select %p304, %s19, 1
        %p306 = scmp.lt.s32.totalorder %s303, 2
        %s307 = scalar_select %p306, %s303, 2
        %s308 = smul.addr %s305, 6
        %s309 = sadd.s32 %s307, %s308
        %s310 = smul.addr %s309, 4
        %s311 = scalar_lea.vmem %s4, %s310
        %s312 = smul.u32 3, %s20
        %s313 = sadd.s32 %s20, 1
        %s314 = smul.u32 3, %s313
        %s315 = smul.u32 3, %s20
        %p316 = scmp.lt.s32.totalorder %s19, 1
        %s317 = scalar_select %p316, %s19, 1
        %p318 = scmp.lt.s32.totalorder %s315, 2
        %s319 = scalar_select %p318, %s315, 2
        %s320 = smul.addr %s317, 6
        %s321 = sadd.s32 %s319, %s320
        %s322 = smul.addr %s321, 4
        %s323 = scalar_lea.vmem %s4, %s322
        %s324 = smul.u32 3, %s20
        %v326 = vld [vmem:[%s274] sm:$0xff]
        %v327 = vld [vmem:[%s274 + $0x8] sm:$0xf]
        %v328 = vld [vmem:[%s274 + $0xc] sm:$0xff]
        %v329 = vld [vmem:[%s274 + $0x14] sm:$0xf]
        %v330 = vld [vmem:[%s281] sm:$0xff]
        %v331 = vld [vmem:[%s281 + $0xc] sm:$0xff]
        %v336 = vunpack.c.l.b16 %v326
        %v337 = vunpack.c.h.b16 %v326
        %v338 = vunpack.c.l.b16 %v327
        %v339 = vunpack.c.l.b16 %v328
        %v340 = vunpack.c.h.b16 %v328
        %v341 = vunpack.c.l.b16 %v329
        %v342 = vpack.c.b16 %v339, %v336
        %v343 = vpack.c.b16 %v340, %v337
        %v344 = vpack.c.b16 %v341, %v338
        %v350 = vunpack.c.l.b16 %v330
        %v351 = vunpack.c.l.b16 %v331
        %v352 = vpack.c.b16 %v351, %v350
        %v353 = vld [vmem:[%s2] sm:$0xf]
        %v354 = vld [vmem:[%s2 + $0x4] sm:$0xf]
        %s355 = scalar_lea.vmem %s2, 8
        %v356 = vld [vmem:[%s355] sm:$0xf]
        %v357 = vld [vmem:[%s355 + $0x4] sm:$0xf]
        %v360 = vunpack.c.l.b16 %v356
        %v361 = vunpack.c.l.b16 %v357
        %v362 = vpack.c.b16 %v361, %v360
        %363 = vrot.lane.b32.xlu0 %v342, 127
        %v364 = vpop.permute.xlu0 %363
        %365 = vrot.lane.b32.xlu0 %v343, 127
        %v366 = vpop.permute.xlu0 %365
        %367 = vrot.lane.b32.xlu0 %v344, 127
        %v368 = vpop.permute.xlu0 %367
        %369 = vrot.lane.b32.xlu0 %v352, 127
        %v370 = vpop.permute.xlu0 %369
        %vm371 = vcmask 1039360
        %v372 = vsel %vm371, %v364, %v366
        %v373 = vsel %vm371, %v366, %v368
        %v374 = vsel %vm371, %v368, %v370
        %vm378 = vcmask 130048
        %v380 = vsel %vm378, %v362, 0
        %382 = vmatprep.subr.bf16.mxu0 %v373
        %383 = vmatpush1.bf16.msra.mxu0 %v372
        %384 = vmatprep.subr.bf16.mxu0 0
        %385 = vmatpush1.bf16.msra.mxu0 0
        %386 = vmatprep.subr.bf16.mxu0 0
        %387 = vmatpush1.bf16.msra.mxu0 0
        %388 = vmatprep.subr.bf16.mxu0 0
        %389 = vmatpush1.bf16.msra.mxu0 0
        %390 = vmatprep.subr.bf16.mxu0 0
        %391 = vmatpush1.bf16.msra.mxu0 0
        %392 = vmatprep.subr.bf16.mxu0 0
        %393 = vmatpush1.bf16.msra.mxu0 0
        %394 = vmatprep.subr.bf16.mxu0 0
        %395 = vmatpush1.bf16.msra.mxu0 0
        %396 = vmatprep.subr.bf16.mxu0 0
        %397 = vmatpush1.bf16.msra.mxu0 0
        %398 = vmatprep.subr.bf16.mxu0 0
        %399 = vmatpush1.bf16.msra.mxu0 0
        %400 = vmatprep.subr.bf16.mxu0 0
        %401 = vmatpush1.bf16.msra.mxu0 0
        %402 = vmatprep.subr.bf16.mxu0 0
        %403 = vmatpush1.bf16.msra.mxu0 0
        %404 = vmatprep.subr.bf16.mxu0 0
        %405 = vmatpush1.bf16.msra.mxu0 0
        %406 = vmatprep.subr.bf16.mxu0 0
        %407 = vmatpush1.bf16.msra.mxu0 0
        %408 = vmatprep.subr.bf16.mxu0 0
        %409 = vmatpush1.bf16.msra.mxu0 0
        %410 = vmatprep.subr.bf16.mxu0 0
        %411 = vmatpush1.bf16.msra.mxu0 0
        %412 = vmatprep.subr.bf16.mxu0 0
        %413 = vmatpush1.bf16.msra.mxu0 0
        %414 = vmatprep.mubr.bf16.mxu0 0
        %415 = vmatmul.mubr.bf16.gmra.mrb[0].mxu0 %v380
        %v416 = vpop.f32.mrb[0].mxu0
        %v417 = vadd.f32 0.0, %v416
        %v418 = vpop.f32.mrb[0].mxu0
        %v419 = vadd.f32 0.0, %v418
        %v420 = vpop.f32.mrb[0].mxu0
        %v421 = vadd.f32 0.0, %v420
        %v422 = vpop.f32.mrb[0].mxu0
        %v423 = vadd.f32 0.0, %v422
        %424 = vdwg.mxu0
        %425 = vmatprep.subr.bf16.mxu0 0
        %426 = vmatpush1.bf16.msra.mxu0 %v374
        %427 = vmatprep.subr.bf16.mxu0 0
        %428 = vmatpush1.bf16.msra.mxu0 0
        %429 = vmatprep.subr.bf16.mxu0 0
        %430 = vmatpush1.bf16.msra.mxu0 0
        %431 = vmatprep.subr.bf16.mxu0 0
        %432 = vmatpush1.bf16.msra.mxu0 0
        %433 = vmatprep.subr.bf16.mxu0 0
        %434 = vmatpush1.bf16.msra.mxu0 0
        %435 = vmatprep.subr.bf16.mxu0 0
        %436 = vmatpush1.bf16.msra.mxu0 0
        %437 = vmatprep.subr.bf16.mxu0 0
        %438 = vmatpush1.bf16.msra.mxu0 0
        %439 = vmatprep.subr.bf16.mxu0 0
        %440 = vmatpush1.bf16.msra.mxu0 0
        %441 = vmatprep.subr.bf16.mxu0 0
        %442 = vmatpush1.bf16.msra.mxu0 0
        %443 = vmatprep.subr.bf16.mxu0 0
        %444 = vmatpush1.bf16.msra.mxu0 0
        %445 = vmatprep.subr.bf16.mxu0 0
        %446 = vmatpush1.bf16.msra.mxu0 0
        %447 = vmatprep.subr.bf16.mxu0 0
        %448 = vmatpush1.bf16.msra.mxu0 0
        %449 = vmatprep.subr.bf16.mxu0 0
        %450 = vmatpush1.bf16.msra.mxu0 0
        %451 = vmatprep.subr.bf16.mxu0 0
        %452 = vmatpush1.bf16.msra.mxu0 0
        %453 = vmatprep.subr.bf16.mxu0 0
        %454 = vmatpush1.bf16.msra.mxu0 0
        %455 = vmatprep.subr.bf16.mxu0 0
        %456 = vmatpush1.bf16.msra.mxu0 0
        %457 = vmatprep.mubr.bf16.mxu0 0
        %458 = vmatmul.mubr.bf16.gmra.mrb[0].mxu0 %v380
        %v459 = vpop.f32.mrb[0].mxu0
        %v460 = vadd.f32 0.0, %v459
        %v461 = vpop.f32.mrb[0].mxu0
        %v462 = vpop.f32.mrb[0].mxu0
        %v463 = vadd.f32 0.0, %v462
        %v464 = vpop.f32.mrb[0].mxu0
        %465 = vdwg.mxu0
        %v468 = vunpack.c.l.b16 %v353
        %v469 = vunpack.c.l.b16 %v354
        %v470 = vpack.c.b16 %v469, %v468
        %v472 = vsel %vm378, %v470, 0
        %474 = vmatprep.subr.bf16.mxu0 %v343
        %475 = vmatpush1.bf16.msra.mxu0 %v342
        %476 = vmatprep.subr.bf16.mxu0 0
        %477 = vmatpush1.bf16.msra.mxu0 0
        %478 = vmatprep.subr.bf16.mxu0 0
        %479 = vmatpush1.bf16.msra.mxu0 0
        %480 = vmatprep.subr.bf16.mxu0 0
        %481 = vmatpush1.bf16.msra.mxu0 0
        %482 = vmatprep.subr.bf16.mxu0 0
        %483 = vmatpush1.bf16.msra.mxu0 0
        %484 = vmatprep.subr.bf16.mxu0 0
        %485 = vmatpush1.bf16.msra.mxu0 0
        %486 = vmatprep.subr.bf16.mxu0 0
        %487 = vmatpush1.bf16.msra.mxu0 0
        %488 = vmatprep.subr.bf16.mxu0 0
        %489 = vmatpush1.bf16.msra.mxu0 0
        %490 = vmatprep.subr.bf16.mxu0 0
        %491 = vmatpush1.bf16.msra.mxu0 0
        %492 = vmatprep.subr.bf16.mxu0 0
        %493 = vmatpush1.bf16.msra.mxu0 0
        %494 = vmatprep.subr.bf16.mxu0 0
        %495 = vmatpush1.bf16.msra.mxu0 0
        %496 = vmatprep.subr.bf16.mxu0 0
        %497 = vmatpush1.bf16.msra.mxu0 0
        %498 = vmatprep.subr.bf16.mxu0 0
        %499 = vmatpush1.bf16.msra.mxu0 0
        %500 = vmatprep.subr.bf16.mxu0 0
        %501 = vmatpush1.bf16.msra.mxu0 0
        %502 = vmatprep.subr.bf16.mxu0 0
        %503 = vmatpush1.bf16.msra.mxu0 0
        %504 = vmatprep.subr.bf16.mxu0 0
        %505 = vmatpush1.bf16.msra.mxu0 0
        %506 = vmatprep.mubr.bf16.mxu0 0
        %507 = vmatmul.mubr.bf16.gmra.mrb[0].mxu0 %v472
        %v508 = vpop.f32.mrb[0].mxu0
        %v509 = vadd.f32 %v417, %v508
        %v510 = vpop.f32.mrb[0].mxu0
        %v511 = vadd.f32 %v419, %v510
        %v512 = vpop.f32.mrb[0].mxu0
        %v513 = vadd.f32 %v421, %v512
        %v514 = vpop.f32.mrb[0].mxu0
        %v515 = vadd.f32 %v423, %v514
        %516 = vdwg.mxu0
        %517 = vmatprep.subr.bf16.mxu0 0
        %518 = vmatpush1.bf16.msra.mxu0 %v344
        %519 = vmatprep.subr.bf16.mxu0 0
        %520 = vmatpush1.bf16.msra.mxu0 0
        %521 = vmatprep.subr.bf16.mxu0 0
        %522 = vmatpush1.bf16.msra.mxu0 0
        %523 = vmatprep.subr.bf16.mxu0 0
        %524 = vmatpush1.bf16.msra.mxu0 0
        %525 = vmatprep.subr.bf16.mxu0 0
        %526 = vmatpush1.bf16.msra.mxu0 0
        %527 = vmatprep.subr.bf16.mxu0 0
        %528 = vmatpush1.bf16.msra.mxu0 0
        %529 = vmatprep.subr.bf16.mxu0 0
        %530 = vmatpush1.bf16.msra.mxu0 0
        %531 = vmatprep.subr.bf16.mxu0 0
        %532 = vmatpush1.bf16.msra.mxu0 0
        %533 = vmatprep.subr.bf16.mxu0 0
        %534 = vmatpush1.bf16.msra.mxu0 0
        %535 = vmatprep.subr.bf16.mxu0 0
        %536 = vmatpush1.bf16.msra.mxu0 0
        %537 = vmatprep.subr.bf16.mxu0 0
        %538 = vmatpush1.bf16.msra.mxu0 0
        %539 = vmatprep.subr.bf16.mxu0 0
        %540 = vmatpush1.bf16.msra.mxu0 0
        %541 = vmatprep.subr.bf16.mxu0 0
        %542 = vmatpush1.bf16.msra.mxu0 0
        %543 = vmatprep.subr.bf16.mxu0 0
        %544 = vmatpush1.bf16.msra.mxu0 0
        %545 = vmatprep.subr.bf16.mxu0 0
        %546 = vmatpush1.bf16.msra.mxu0 0
        %547 = vmatprep.subr.bf16.mxu0 0
        %548 = vmatpush1.bf16.msra.mxu0 0
        %549 = vmatprep.mubr.bf16.mxu0 0
        %550 = vmatmul.mubr.bf16.gmra.mrb[0].mxu0 %v472
        %v551 = vpop.f32.mrb[0].mxu0
        %v552 = vadd.f32 %v460, %v551
        %v553 = vpop.f32.mrb[0].mxu0
        %v554 = vpop.f32.mrb[0].mxu0
        %v555 = vadd.f32 %v463, %v554
        %v556 = vpop.f32.mrb[0].mxu0
        %557 = vdwg.mxu0
        %s558 = scalar_lea.vmem %s2, 16
        %v559 = vld [vmem:[%s558] sm:$0xf]
        %v560 = vld [vmem:[%s558 + $0x4] sm:$0xf]
        %v563 = vunpack.c.l.b16 %v559
        %v564 = vunpack.c.l.b16 %v560
        %v565 = vpack.c.b16 %v564, %v563
        %566 = vrot.lane.b32.xlu0 %v342, 126
        %v567 = vpop.permute.xlu0 %566
        %568 = vrot.lane.b32.xlu0 %v343, 126
        %v569 = vpop.permute.xlu0 %568
        %570 = vrot.lane.b32.xlu0 %v344, 126
        %v571 = vpop.permute.xlu0 %570
        %572 = vrot.lane.b32.xlu0 %v352, 126
        %v573 = vpop.permute.xlu0 %572
        %vm574 = vcmask 1031168
        %v575 = vsel %vm574, %v567, %v569
        %v576 = vsel %vm574, %v569, %v571
        %v577 = vsel %vm574, %v571, %v573
        %v582 = vsel %vm378, %v565, 0
        %584 = vmatprep.subr.bf16.mxu0 %v576
        %585 = vmatpush1.bf16.msra.mxu0 %v575
        %586 = vmatprep.subr.bf16.mxu0 0
        %587 = vmatpush1.bf16.msra.mxu0 0
        %588 = vmatprep.subr.bf16.mxu0 0
        %589 = vmatpush1.bf16.msra.mxu0 0
        %590 = vmatprep.subr.bf16.mxu0 0
        %591 = vmatpush1.bf16.msra.mxu0 0
        %592 = vmatprep.subr.bf16.mxu0 0
        %593 = vmatpush1.bf16.msra.mxu0 0
        %594 = vmatprep.subr.bf16.mxu0 0
        %595 = vmatpush1.bf16.msra.mxu0 0
        %596 = vmatprep.subr.bf16.mxu0 0
        %597 = vmatpush1.bf16.msra.mxu0 0
        %598 = vmatprep.subr.bf16.mxu0 0
        %599 = vmatpush1.bf16.msra.mxu0 0
        %600 = vmatprep.subr.bf16.mxu0 0
        %601 = vmatpush1.bf16.msra.mxu0 0
        %602 = vmatprep.subr.bf16.mxu0 0
        %603 = vmatpush1.bf16.msra.mxu0 0
        %604 = vmatprep.subr.bf16.mxu0 0
        %605 = vmatpush1.bf16.msra.mxu0 0
        %606 = vmatprep.subr.bf16.mxu0 0
        %607 = vmatpush1.bf16.msra.mxu0 0
        %608 = vmatprep.subr.bf16.mxu0 0
        %609 = vmatpush1.bf16.msra.mxu0 0
        %610 = vmatprep.subr.bf16.mxu0 0
        %611 = vmatpush1.bf16.msra.mxu0 0
        %612 = vmatprep.subr.bf16.mxu0 0
        %613 = vmatpush1.bf16.msra.mxu0 0
        %614 = vmatprep.subr.bf16.mxu0 0
        %615 = vmatpush1.bf16.msra.mxu0 0
        %616 = vmatprep.mubr.bf16.mxu0 0
        %617 = vmatmul.mubr.bf16.gmra.mrb[0].mxu0 %v582
        %v618 = vpop.f32.mrb[0].mxu0
        %v619 = vadd.f32 0.0, %v618
        %v620 = vpop.f32.mrb[0].mxu0
        %v621 = vadd.f32 0.0, %v620
        %v622 = vpop.f32.mrb[0].mxu0
        %v623 = vadd.f32 0.0, %v622
        %v624 = vpop.f32.mrb[0].mxu0
        %v625 = vadd.f32 0.0, %v624
        %626 = vdwg.mxu0
        %627 = vmatprep.subr.bf16.mxu0 0
        %628 = vmatpush1.bf16.msra.mxu0 %v577
        %629 = vmatprep.subr.bf16.mxu0 0
        %630 = vmatpush1.bf16.msra.mxu0 0
        %631 = vmatprep.subr.bf16.mxu0 0
        %632 = vmatpush1.bf16.msra.mxu0 0
        %633 = vmatprep.subr.bf16.mxu0 0
        %634 = vmatpush1.bf16.msra.mxu0 0
        %635 = vmatprep.subr.bf16.mxu0 0
        %636 = vmatpush1.bf16.msra.mxu0 0
        %637 = vmatprep.subr.bf16.mxu0 0
        %638 = vmatpush1.bf16.msra.mxu0 0
        %639 = vmatprep.subr.bf16.mxu0 0
        %640 = vmatpush1.bf16.msra.mxu0 0
        %641 = vmatprep.subr.bf16.mxu0 0
        %642 = vmatpush1.bf16.msra.mxu0 0
        %643 = vmatprep.subr.bf16.mxu0 0
        %644 = vmatpush1.bf16.msra.mxu0 0
        %645 = vmatprep.subr.bf16.mxu0 0
        %646 = vmatpush1.bf16.msra.mxu0 0
        %647 = vmatprep.subr.bf16.mxu0 0
        %648 = vmatpush1.bf16.msra.mxu0 0
        %649 = vmatprep.subr.bf16.mxu0 0
        %650 = vmatpush1.bf16.msra.mxu0 0
        %651 = vmatprep.subr.bf16.mxu0 0
        %652 = vmatpush1.bf16.msra.mxu0 0
        %653 = vmatprep.subr.bf16.mxu0 0
        %654 = vmatpush1.bf16.msra.mxu0 0
        %655 = vmatprep.subr.bf16.mxu0 0
        %656 = vmatpush1.bf16.msra.mxu0 0
        %657 = vmatprep.subr.bf16.mxu0 0
        %658 = vmatpush1.bf16.msra.mxu0 0
        %659 = vmatprep.mubr.bf16.mxu0 0
        %660 = vmatmul.mubr.bf16.gmra.mrb[0].mxu0 %v582
        %v661 = vpop.f32.mrb[0].mxu0
        %v662 = vadd.f32 0.0, %v661
        %v663 = vpop.f32.mrb[0].mxu0
        %v664 = vpop.f32.mrb[0].mxu0
        %v665 = vadd.f32 0.0, %v664
        %v666 = vpop.f32.mrb[0].mxu0
        %667 = vdwg.mxu0
        %v668 = vadd.f32 %v509, %v619
        %v669 = vadd.f32 %v511, %v621
        %v670 = vadd.f32 %v552, %v662
        %v671 = vadd.f32 %v513, %v623
        %v672 = vadd.f32 %v515, %v625
        %v673 = vadd.f32 %v555, %v665
        %s674 = scalar_lea.vmem %s2, 24
        %v675 = vld [vmem:[%s674] sm:$0xf]
        %v676 = vld [vmem:[%s674 + $0x4] sm:$0xf]
        %v679 = vunpack.c.l.b16 %v675
        %v680 = vunpack.c.l.b16 %v676
        %v681 = vpack.c.b16 %v680, %v679
        %682 = vrot.lane.b32.xlu0 %v342, 110
        %v683 = vpop.permute.xlu0 %682
        %684 = vrot.lane.b32.xlu0 %v343, 110
        %v685 = vpop.permute.xlu0 %684
        %686 = vrot.lane.b32.xlu0 %v344, 110
        %v687 = vpop.permute.xlu0 %686
        %688 = vrot.lane.b32.xlu0 %v352, 110
        %v689 = vpop.permute.xlu0 %688
        %vm690 = vcmask 900096
        %v691 = vsel %vm690, %v683, %v685
        %v692 = vsel %vm690, %v685, %v687
        %v693 = vsel %vm690, %v687, %v689
        %v698 = vsel %vm378, %v681, 0
        %700 = vmatprep.subr.bf16.mxu0 %v692
        %701 = vmatpush1.bf16.msra.mxu0 %v691
        %702 = vmatprep.subr.bf16.mxu0 0
        %703 = vmatpush1.bf16.msra.mxu0 0
        %704 = vmatprep.subr.bf16.mxu0 0
        %705 = vmatpush1.bf16.msra.mxu0 0
        %706 = vmatprep.subr.bf16.mxu0 0
        %707 = vmatpush1.bf16.msra.mxu0 0
        %708 = vmatprep.subr.bf16.mxu0 0
        %709 = vmatpush1.bf16.msra.mxu0 0
        %710 = vmatprep.subr.bf16.mxu0 0
        %711 = vmatpush1.bf16.msra.mxu0 0
        %712 = vmatprep.subr.bf16.mxu0 0
        %713 = vmatpush1.bf16.msra.mxu0 0
        %714 = vmatprep.subr.bf16.mxu0 0
        %715 = vmatpush1.bf16.msra.mxu0 0
        %716 = vmatprep.subr.bf16.mxu0 0
        %717 = vmatpush1.bf16.msra.mxu0 0
        %718 = vmatprep.subr.bf16.mxu0 0
        %719 = vmatpush1.bf16.msra.mxu0 0
        %720 = vmatprep.subr.bf16.mxu0 0
        %721 = vmatpush1.bf16.msra.mxu0 0
        %722 = vmatprep.subr.bf16.mxu0 0
        %723 = vmatpush1.bf16.msra.mxu0 0
        %724 = vmatprep.subr.bf16.mxu0 0
        %725 = vmatpush1.bf16.msra.mxu0 0
        %726 = vmatprep.subr.bf16.mxu0 0
        %727 = vmatpush1.bf16.msra.mxu0 0
        %728 = vmatprep.subr.bf16.mxu0 0
        %729 = vmatpush1.bf16.msra.mxu0 0
        %730 = vmatprep.subr.bf16.mxu0 0
        %731 = vmatpush1.bf16.msra.mxu0 0
        %732 = vmatprep.mubr.bf16.mxu0 0
        %733 = vmatmul.mubr.bf16.gmra.mrb[0].mxu0 %v698
        %v734 = vpop.f32.mrb[0].mxu0
        %v735 = vadd.f32 0.0, %v734
        %v736 = vpop.f32.mrb[0].mxu0
        %v737 = vadd.f32 0.0, %v736
        %v738 = vpop.f32.mrb[0].mxu0
        %v739 = vadd.f32 0.0, %v738
        %v740 = vpop.f32.mrb[0].mxu0
        %v741 = vadd.f32 0.0, %v740
        %742 = vdwg.mxu0
        %743 = vmatprep.subr.bf16.mxu0 0
        %744 = vmatpush1.bf16.msra.mxu0 %v693
        %745 = vmatprep.subr.bf16.mxu0 0
        %746 = vmatpush1.bf16.msra.mxu0 0
        %747 = vmatprep.subr.bf16.mxu0 0
        %748 = vmatpush1.bf16.msra.mxu0 0
        %749 = vmatprep.subr.bf16.mxu0 0
        %750 = vmatpush1.bf16.msra.mxu0 0
        %751 = vmatprep.subr.bf16.mxu0 0
        %752 = vmatpush1.bf16.msra.mxu0 0
        %753 = vmatprep.subr.bf16.mxu0 0
        %754 = vmatpush1.bf16.msra.mxu0 0
        %755 = vmatprep.subr.bf16.mxu0 0
        %756 = vmatpush1.bf16.msra.mxu0 0
        %757 = vmatprep.subr.bf16.mxu0 0
        %758 = vmatpush1.bf16.msra.mxu0 0
        %759 = vmatprep.subr.bf16.mxu0 0
        %760 = vmatpush1.bf16.msra.mxu0 0
        %761 = vmatprep.subr.bf16.mxu0 0
        %762 = vmatpush1.bf16.msra.mxu0 0
        %763 = vmatprep.subr.bf16.mxu0 0
        %764 = vmatpush1.bf16.msra.mxu0 0
        %765 = vmatprep.subr.bf16.mxu0 0
        %766 = vmatpush1.bf16.msra.mxu0 0
        %767 = vmatprep.subr.bf16.mxu0 0
        %768 = vmatpush1.bf16.msra.mxu0 0
        %769 = vmatprep.subr.bf16.mxu0 0
        %770 = vmatpush1.bf16.msra.mxu0 0
        %771 = vmatprep.subr.bf16.mxu0 0
        %772 = vmatpush1.bf16.msra.mxu0 0
        %773 = vmatprep.subr.bf16.mxu0 0
        %774 = vmatpush1.bf16.msra.mxu0 0
        %775 = vmatprep.mubr.bf16.mxu0 0
        %776 = vmatmul.mubr.bf16.gmra.mrb[0].mxu0 %v698
        %v777 = vpop.f32.mrb[0].mxu0
        %v778 = vadd.f32 0.0, %v777
        %v779 = vpop.f32.mrb[0].mxu0
        %v780 = vpop.f32.mrb[0].mxu0
        %v781 = vadd.f32 0.0, %v780
        %v782 = vpop.f32.mrb[0].mxu0
        %783 = vdwg.mxu0
        %v784 = vadd.f32 %v668, %v735
        %v785 = vadd.f32 %v669, %v737
        %v786 = vadd.f32 %v670, %v778
        %v787 = vadd.f32 %v671, %v739
        %v788 = vadd.f32 %v672, %v741
        %v789 = vadd.f32 %v673, %v781
        %s790 = scalar_lea.vmem %s2, 32
        %v791 = vld [vmem:[%s790] sm:$0xf]
        %v792 = vld [vmem:[%s790 + $0x4] sm:$0xf]
        %v795 = vunpack.c.l.b16 %v791
        %v796 = vunpack.c.l.b16 %v792
        %v797 = vpack.c.b16 %v796, %v795
        %798 = vrot.lane.b32.xlu0 %v342, 109
        %v799 = vpop.permute.xlu0 %798
        %800 = vrot.lane.b32.xlu0 %v343, 109
        %v801 = vpop.permute.xlu0 %800
        %802 = vrot.lane.b32.xlu0 %v344, 109
        %v803 = vpop.permute.xlu0 %802
        %804 = vrot.lane.b32.xlu0 %v352, 109
        %v805 = vpop.permute.xlu0 %804
        %vm806 = vcmask 891904
        %v807 = vsel %vm806, %v799, %v801
        %v808 = vsel %vm806, %v801, %v803
        %v809 = vsel %vm806, %v803, %v805
        %v814 = vsel %vm378, %v797, 0
        %816 = vmatprep.subr.bf16.mxu0 %v808
        %817 = vmatpush1.bf16.msra.mxu0 %v807
        %818 = vmatprep.subr.bf16.mxu0 0
        %819 = vmatpush1.bf16.msra.mxu0 0
        %820 = vmatprep.subr.bf16.mxu0 0
        %821 = vmatpush1.bf16.msra.mxu0 0
        %822 = vmatprep.subr.bf16.mxu0 0
        %823 = vmatpush1.bf16.msra.mxu0 0
        %824 = vmatprep.subr.bf16.mxu0 0
        %825 = vmatpush1.bf16.msra.mxu0 0
        %826 = vmatprep.subr.bf16.mxu0 0
        %827 = vmatpush1.bf16.msra.mxu0 0
        %828 = vmatprep.subr.bf16.mxu0 0
        %829 = vmatpush1.bf16.msra.mxu0 0
        %830 = vmatprep.subr.bf16.mxu0 0
        %831 = vmatpush1.bf16.msra.mxu0 0
        %832 = vmatprep.subr.bf16.mxu0 0
        %833 = vmatpush1.bf16.msra.mxu0 0
        %834 = vmatprep.subr.bf16.mxu0 0
        %835 = vmatpush1.bf16.msra.mxu0 0
        %836 = vmatprep.subr.bf16.mxu0 0
        %837 = vmatpush1.bf16.msra.mxu0 0
        %838 = vmatprep.subr.bf16.mxu0 0
        %839 = vmatpush1.bf16.msra.mxu0 0
        %840 = vmatprep.subr.bf16.mxu0 0
        %841 = vmatpush1.bf16.msra.mxu0 0
        %842 = vmatprep.subr.bf16.mxu0 0
        %843 = vmatpush1.bf16.msra.mxu0 0
        %844 = vmatprep.subr.bf16.mxu0 0
        %845 = vmatpush1.bf16.msra.mxu0 0
        %846 = vmatprep.subr.bf16.mxu0 0
        %847 = vmatpush1.bf16.msra.mxu0 0
        %848 = vmatprep.mubr.bf16.mxu0 0
        %849 = vmatmul.mubr.bf16.gmra.mrb[0].mxu0 %v814
        %v850 = vpop.f32.mrb[0].mxu0
        %v851 = vadd.f32 0.0, %v850
        %v852 = vpop.f32.mrb[0].mxu0
        %v853 = vadd.f32 0.0, %v852
        %v854 = vpop.f32.mrb[0].mxu0
        %v855 = vadd.f32 0.0, %v854
        %v856 = vpop.f32.mrb[0].mxu0
        %v857 = vadd.f32 0.0, %v856
        %858 = vdwg.mxu0
        %859 = vmatprep.subr.bf16.mxu0 0
        %860 = vmatpush1.bf16.msra.mxu0 %v809
        %861 = vmatprep.subr.bf16.mxu0 0
        %862 = vmatpush1.bf16.msra.mxu0 0
        %863 = vmatprep.subr.bf16.mxu0 0
        %864 = vmatpush1.bf16.msra.mxu0 0
        %865 = vmatprep.subr.bf16.mxu0 0
        %866 = vmatpush1.bf16.msra.mxu0 0
        %867 = vmatprep.subr.bf16.mxu0 0
        %868 = vmatpush1.bf16.msra.mxu0 0
        %869 = vmatprep.subr.bf16.mxu0 0
        %870 = vmatpush1.bf16.msra.mxu0 0
        %871 = vmatprep.subr.bf16.mxu0 0
        %872 = vmatpush1.bf16.msra.mxu0 0
        %873 = vmatprep.subr.bf16.mxu0 0
        %874 = vmatpush1.bf16.msra.mxu0 0
        %875 = vmatprep.subr.bf16.mxu0 0
        %876 = vmatpush1.bf16.msra.mxu0 0
        %877 = vmatprep.subr.bf16.mxu0 0
        %878 = vmatpush1.bf16.msra.mxu0 0
        %879 = vmatprep.subr.bf16.mxu0 0
        %880 = vmatpush1.bf16.msra.mxu0 0
        %881 = vmatprep.subr.bf16.mxu0 0
        %882 = vmatpush1.bf16.msra.mxu0 0
        %883 = vmatprep.subr.bf16.mxu0 0
        %884 = vmatpush1.bf16.msra.mxu0 0
        %885 = vmatprep.subr.bf16.mxu0 0
        %886 = vmatpush1.bf16.msra.mxu0 0
        %887 = vmatprep.subr.bf16.mxu0 0
        %888 = vmatpush1.bf16.msra.mxu0 0
        %889 = vmatprep.subr.bf16.mxu0 0
        %890 = vmatpush1.bf16.msra.mxu0 0
        %891 = vmatprep.mubr.bf16.mxu0 0
        %892 = vmatmul.mubr.bf16.gmra.mrb[0].mxu0 %v814
        %v893 = vpop.f32.mrb[0].mxu0
        %v894 = vadd.f32 0.0, %v893
        %v895 = vpop.f32.mrb[0].mxu0
        %v896 = vpop.f32.mrb[0].mxu0
        %v897 = vadd.f32 0.0, %v896
        %v898 = vpop.f32.mrb[0].mxu0
        %899 = vdwg.mxu0
        %v900 = vadd.f32 %v784, %v851
        %v901 = vadd.f32 %v785, %v853
        %v902 = vadd.f32 %v786, %v894
        %v903 = vadd.f32 %v787, %v855
        %v904 = vadd.f32 %v788, %v857
        %v905 = vadd.f32 %v789, %v897
        %s906 = scalar_lea.vmem %s2, 40
        %v907 = vld [vmem:[%s906] sm:$0xf]
        %v908 = vld [vmem:[%s906 + $0x4] sm:$0xf]
        %v911 = vunpack.c.l.b16 %v907
        %v912 = vunpack.c.l.b16 %v908
        %v913 = vpack.c.b16 %v912, %v911
        %914 = vrot.lane.b32.xlu0 %v342, 108
        %v915 = vpop.permute.xlu0 %914
        %916 = vrot.lane.b32.xlu0 %v343, 108
        %v917 = vpop.permute.xlu0 %916
        %918 = vrot.lane.b32.xlu0 %v344, 108
        %v919 = vpop.permute.xlu0 %918
        %920 = vrot.lane.b32.xlu0 %v352, 108
        %v921 = vpop.permute.xlu0 %920
        %vm922 = vcmask 883712
        %v923 = vsel %vm922, %v915, %v917
        %v924 = vsel %vm922, %v917, %v919
        %v925 = vsel %vm922, %v919, %v921
        %v930 = vsel %vm378, %v913, 0
        %932 = vmatprep.subr.bf16.mxu0 %v924
        %933 = vmatpush1.bf16.msra.mxu0 %v923
        %934 = vmatprep.subr.bf16.mxu0 0
        %935 = vmatpush1.bf16.msra.mxu0 0
        %936 = vmatprep.subr.bf16.mxu0 0
        %937 = vmatpush1.bf16.msra.mxu0 0
        %938 = vmatprep.subr.bf16.mxu0 0
        %939 = vmatpush1.bf16.msra.mxu0 0
        %940 = vmatprep.subr.bf16.mxu0 0
        %941 = vmatpush1.bf16.msra.mxu0 0
        %942 = vmatprep.subr.bf16.mxu0 0
        %943 = vmatpush1.bf16.msra.mxu0 0
        %944 = vmatprep.subr.bf16.mxu0 0
        %945 = vmatpush1.bf16.msra.mxu0 0
        %946 = vmatprep.subr.bf16.mxu0 0
        %947 = vmatpush1.bf16.msra.mxu0 0
        %948 = vmatprep.subr.bf16.mxu0 0
        %949 = vmatpush1.bf16.msra.mxu0 0
        %950 = vmatprep.subr.bf16.mxu0 0
        %951 = vmatpush1.bf16.msra.mxu0 0
        %952 = vmatprep.subr.bf16.mxu0 0
        %953 = vmatpush1.bf16.msra.mxu0 0
        %954 = vmatprep.subr.bf16.mxu0 0
        %955 = vmatpush1.bf16.msra.mxu0 0
        %956 = vmatprep.subr.bf16.mxu0 0
        %957 = vmatpush1.bf16.msra.mxu0 0
        %958 = vmatprep.subr.bf16.mxu0 0
        %959 = vmatpush1.bf16.msra.mxu0 0
        %960 = vmatprep.subr.bf16.mxu0 0
        %961 = vmatpush1.bf16.msra.mxu0 0
        %962 = vmatprep.subr.bf16.mxu0 0
        %963 = vmatpush1.bf16.msra.mxu0 0
        %964 = vmatprep.mubr.bf16.mxu0 0
        %965 = vmatmul.mubr.bf16.gmra.mrb[0].mxu0 %v930
        %v966 = vpop.f32.mrb[0].mxu0
        %v967 = vadd.f32 0.0, %v966
        %v968 = vpop.f32.mrb[0].mxu0
        %v969 = vadd.f32 0.0, %v968
        %v970 = vpop.f32.mrb[0].mxu0
        %v971 = vadd.f32 0.0, %v970
        %v972 = vpop.f32.mrb[0].mxu0
        %v973 = vadd.f32 0.0, %v972
        %974 = vdwg.mxu0
        %975 = vmatprep.subr.bf16.mxu0 0
        %976 = vmatpush1.bf16.msra.mxu0 %v925
        %977 = vmatprep.subr.bf16.mxu0 0
        %978 = vmatpush1.bf16.msra.mxu0 0
        %979 = vmatprep.subr.bf16.mxu0 0
        %980 = vmatpush1.bf16.msra.mxu0 0
        %981 = vmatprep.subr.bf16.mxu0 0
        %982 = vmatpush1.bf16.msra.mxu0 0
        %983 = vmatprep.subr.bf16.mxu0 0
        %984 = vmatpush1.bf16.msra.mxu0 0
        %985 = vmatprep.subr.bf16.mxu0 0
        %986 = vmatpush1.bf16.msra.mxu0 0
        %987 = vmatprep.subr.bf16.mxu0 0
        %988 = vmatpush1.bf16.msra.mxu0 0
        %989 = vmatprep.subr.bf16.mxu0 0
        %990 = vmatpush1.bf16.msra.mxu0 0
        %991 = vmatprep.subr.bf16.mxu0 0
        %992 = vmatpush1.bf16.msra.mxu0 0
        %993 = vmatprep.subr.bf16.mxu0 0
        %994 = vmatpush1.bf16.msra.mxu0 0
        %995 = vmatprep.subr.bf16.mxu0 0
        %996 = vmatpush1.bf16.msra.mxu0 0
        %997 = vmatprep.subr.bf16.mxu0 0
        %998 = vmatpush1.bf16.msra.mxu0 0
        %999 = vmatprep.subr.bf16.mxu0 0
        %1000 = vmatpush1.bf16.msra.mxu0 0
        %1001 = vmatprep.subr.bf16.mxu0 0
        %1002 = vmatpush1.bf16.msra.mxu0 0
        %1003 = vmatprep.subr.bf16.mxu0 0
        %1004 = vmatpush1.bf16.msra.mxu0 0
        %1005 = vmatprep.subr.bf16.mxu0 0
        %1006 = vmatpush1.bf16.msra.mxu0 0
        %1007 = vmatprep.mubr.bf16.mxu0 0
        %1008 = vmatmul.mubr.bf16.gmra.mrb[0].mxu0 %v930
        %v1009 = vpop.f32.mrb[0].mxu0
        %v1010 = vadd.f32 0.0, %v1009
        %v1011 = vpop.f32.mrb[0].mxu0
        %v1012 = vpop.f32.mrb[0].mxu0
        %v1013 = vadd.f32 0.0, %v1012
        %v1014 = vpop.f32.mrb[0].mxu0
        %1015 = vdwg.mxu0
        %v1016 = vadd.f32 %v900, %v967
        %v1017 = vadd.f32 %v901, %v969
        %v1018 = vadd.f32 %v902, %v1010
        %v1019 = vadd.f32 %v903, %v971
        %v1020 = vadd.f32 %v904, %v973
        %v1021 = vadd.f32 %v905, %v1013
        %s1022 = scalar_lea.vmem %s2, 48
        %v1023 = vld [vmem:[%s1022] sm:$0xf]
        %v1024 = vld [vmem:[%s1022 + $0x4] sm:$0xf]
        %v1027 = vunpack.c.l.b16 %v1023
        %v1028 = vunpack.c.l.b16 %v1024
        %v1029 = vpack.c.b16 %v1028, %v1027
        %1030 = vrot.lane.b32.xlu0 %v342, 92
        %v1031 = vpop.permute.xlu0 %1030
        %1032 = vrot.lane.b32.xlu0 %v343, 92
        %v1033 = vpop.permute.xlu0 %1032
        %1034 = vrot.lane.b32.xlu0 %v344, 92
        %v1035 = vpop.permute.xlu0 %1034
        %1036 = vrot.lane.b32.xlu0 %v352, 92
        %v1037 = vpop.permute.xlu0 %1036
        %vm1038 = vcmask 752640
        %v1039 = vsel %vm1038, %v1031, %v1033
        %v1040 = vsel %vm1038, %v1033, %v1035
        %v1041 = vsel %vm1038, %v1035, %v1037
        %v1046 = vsel %vm378, %v1029, 0
        %1048 = vmatprep.subr.bf16.mxu0 %v1040
        %1049 = vmatpush1.bf16.msra.mxu0 %v1039
        %1050 = vmatprep.subr.bf16.mxu0 0
        %1051 = vmatpush1.bf16.msra.mxu0 0
        %1052 = vmatprep.subr.bf16.mxu0 0
        %1053 = vmatpush1.bf16.msra.mxu0 0
        %1054 = vmatprep.subr.bf16.mxu0 0
        %1055 = vmatpush1.bf16.msra.mxu0 0
        %1056 = vmatprep.subr.bf16.mxu0 0
        %1057 = vmatpush1.bf16.msra.mxu0 0
        %1058 = vmatprep.subr.bf16.mxu0 0
        %1059 = vmatpush1.bf16.msra.mxu0 0
        %1060 = vmatprep.subr.bf16.mxu0 0
        %1061 = vmatpush1.bf16.msra.mxu0 0
        %1062 = vmatprep.subr.bf16.mxu0 0
        %1063 = vmatpush1.bf16.msra.mxu0 0
        %1064 = vmatprep.subr.bf16.mxu0 0
        %1065 = vmatpush1.bf16.msra.mxu0 0
        %1066 = vmatprep.subr.bf16.mxu0 0
        %1067 = vmatpush1.bf16.msra.mxu0 0
        %1068 = vmatprep.subr.bf16.mxu0 0
        %1069 = vmatpush1.bf16.msra.mxu0 0
        %1070 = vmatprep.subr.bf16.mxu0 0
        %1071 = vmatpush1.bf16.msra.mxu0 0
        %1072 = vmatprep.subr.bf16.mxu0 0
        %1073 = vmatpush1.bf16.msra.mxu0 0
        %1074 = vmatprep.subr.bf16.mxu0 0
        %1075 = vmatpush1.bf16.msra.mxu0 0
        %1076 = vmatprep.subr.bf16.mxu0 0
        %1077 = vmatpush1.bf16.msra.mxu0 0
        %1078 = vmatprep.subr.bf16.mxu0 0
        %1079 = vmatpush1.bf16.msra.mxu0 0
        %1080 = vmatprep.mubr.bf16.mxu0 0
        %1081 = vmatmul.mubr.bf16.gmra.mrb[0].mxu0 %v1046
        %v1082 = vpop.f32.mrb[0].mxu0
        %v1083 = vadd.f32 0.0, %v1082
        %v1084 = vpop.f32.mrb[0].mxu0
        %v1085 = vadd.f32 0.0, %v1084
        %v1086 = vpop.f32.mrb[0].mxu0
        %v1087 = vadd.f32 0.0, %v1086
        %v1088 = vpop.f32.mrb[0].mxu0
        %v1089 = vadd.f32 0.0, %v1088
        %1090 = vdwg.mxu0
        %1091 = vmatprep.subr.bf16.mxu0 0
        %1092 = vmatpush1.bf16.msra.mxu0 %v1041
        %1093 = vmatprep.subr.bf16.mxu0 0
        %1094 = vmatpush1.bf16.msra.mxu0 0
        %1095 = vmatprep.subr.bf16.mxu0 0
        %1096 = vmatpush1.bf16.msra.mxu0 0
        %1097 = vmatprep.subr.bf16.mxu0 0
        %1098 = vmatpush1.bf16.msra.mxu0 0
        %1099 = vmatprep.subr.bf16.mxu0 0
        %1100 = vmatpush1.bf16.msra.mxu0 0
        %1101 = vmatprep.subr.bf16.mxu0 0
        %1102 = vmatpush1.bf16.msra.mxu0 0
        %1103 = vmatprep.subr.bf16.mxu0 0
        %1104 = vmatpush1.bf16.msra.mxu0 0
        %1105 = vmatprep.subr.bf16.mxu0 0
        %1106 = vmatpush1.bf16.msra.mxu0 0
        %1107 = vmatprep.subr.bf16.mxu0 0
        %1108 = vmatpush1.bf16.msra.mxu0 0
        %1109 = vmatprep.subr.bf16.mxu0 0
        %1110 = vmatpush1.bf16.msra.mxu0 0
        %1111 = vmatprep.subr.bf16.mxu0 0
        %1112 = vmatpush1.bf16.msra.mxu0 0
        %1113 = vmatprep.subr.bf16.mxu0 0
        %1114 = vmatpush1.bf16.msra.mxu0 0
        %1115 = vmatprep.subr.bf16.mxu0 0
        %1116 = vmatpush1.bf16.msra.mxu0 0
        %1117 = vmatprep.subr.bf16.mxu0 0
        %1118 = vmatpush1.bf16.msra.mxu0 0
        %1119 = vmatprep.subr.bf16.mxu0 0
        %1120 = vmatpush1.bf16.msra.mxu0 0
        %1121 = vmatprep.subr.bf16.mxu0 0
        %1122 = vmatpush1.bf16.msra.mxu0 0
        %1123 = vmatprep.mubr.bf16.mxu0 0
        %1124 = vmatmul.mubr.bf16.gmra.mrb[0].mxu0 %v1046
        %v1125 = vpop.f32.mrb[0].mxu0
        %v1126 = vadd.f32 0.0, %v1125
        %v1127 = vpop.f32.mrb[0].mxu0
        %v1128 = vpop.f32.mrb[0].mxu0
        %v1129 = vadd.f32 0.0, %v1128
        %v1130 = vpop.f32.mrb[0].mxu0
        %1131 = vdwg.mxu0
        %v1132 = vadd.f32 %v1016, %v1083
        %v1133 = vadd.f32 %v1017, %v1085
        %v1134 = vadd.f32 %v1018, %v1126
        %v1135 = vadd.f32 %v1019, %v1087
        %v1136 = vadd.f32 %v1020, %v1089
        %v1137 = vadd.f32 %v1021, %v1129
        %s1138 = scalar_lea.vmem %s2, 56
        %v1139 = vld [vmem:[%s1138] sm:$0xf]
        %v1140 = vld [vmem:[%s1138 + $0x4] sm:$0xf]
        %v1143 = vunpack.c.l.b16 %v1139
        %v1144 = vunpack.c.l.b16 %v1140
        %v1145 = vpack.c.b16 %v1144, %v1143
        %1146 = vrot.lane.b32.xlu0 %v342, 91
        %v1147 = vpop.permute.xlu0 %1146
        %1148 = vrot.lane.b32.xlu0 %v343, 91
        %v1149 = vpop.permute.xlu0 %1148
        %1150 = vrot.lane.b32.xlu0 %v344, 91
        %v1151 = vpop.permute.xlu0 %1150
        %1152 = vrot.lane.b32.xlu0 %v352, 91
        %v1153 = vpop.permute.xlu0 %1152
        %vm1154 = vcmask 744448
        %v1155 = vsel %vm1154, %v1147, %v1149
        %v1156 = vsel %vm1154, %v1149, %v1151
        %v1157 = vsel %vm1154, %v1151, %v1153
        %v1162 = vsel %vm378, %v1145, 0
        %1164 = vmatprep.subr.bf16.mxu0 %v1156
        %1165 = vmatpush1.bf16.msra.mxu0 %v1155
        %1166 = vmatprep.subr.bf16.mxu0 0
        %1167 = vmatpush1.bf16.msra.mxu0 0
        %1168 = vmatprep.subr.bf16.mxu0 0
        %1169 = vmatpush1.bf16.msra.mxu0 0
        %1170 = vmatprep.subr.bf16.mxu0 0
        %1171 = vmatpush1.bf16.msra.mxu0 0
        %1172 = vmatprep.subr.bf16.mxu0 0
        %1173 = vmatpush1.bf16.msra.mxu0 0
        %1174 = vmatprep.subr.bf16.mxu0 0
        %1175 = vmatpush1.bf16.msra.mxu0 0
        %1176 = vmatprep.subr.bf16.mxu0 0
        %1177 = vmatpush1.bf16.msra.mxu0 0
        %1178 = vmatprep.subr.bf16.mxu0 0
        %1179 = vmatpush1.bf16.msra.mxu0 0
        %1180 = vmatprep.subr.bf16.mxu0 0
        %1181 = vmatpush1.bf16.msra.mxu0 0
        %1182 = vmatprep.subr.bf16.mxu0 0
        %1183 = vmatpush1.bf16.msra.mxu0 0
        %1184 = vmatprep.subr.bf16.mxu0 0
        %1185 = vmatpush1.bf16.msra.mxu0 0
        %1186 = vmatprep.subr.bf16.mxu0 0
        %1187 = vmatpush1.bf16.msra.mxu0 0
        %1188 = vmatprep.subr.bf16.mxu0 0
        %1189 = vmatpush1.bf16.msra.mxu0 0
        %1190 = vmatprep.subr.bf16.mxu0 0
        %1191 = vmatpush1.bf16.msra.mxu0 0
        %1192 = vmatprep.subr.bf16.mxu0 0
        %1193 = vmatpush1.bf16.msra.mxu0 0
        %1194 = vmatprep.subr.bf16.mxu0 0
        %1195 = vmatpush1.bf16.msra.mxu0 0
        %1196 = vmatprep.mubr.bf16.mxu0 0
        %1197 = vmatmul.mubr.bf16.gmra.mrb[0].mxu0 %v1162
        %v1198 = vpop.f32.mrb[0].mxu0
        %v1199 = vadd.f32 0.0, %v1198
        %v1200 = vpop.f32.mrb[0].mxu0
        %v1201 = vadd.f32 0.0, %v1200
        %v1202 = vpop.f32.mrb[0].mxu0
        %v1203 = vadd.f32 0.0, %v1202
        %v1204 = vpop.f32.mrb[0].mxu0
        %v1205 = vadd.f32 0.0, %v1204
        %1206 = vdwg.mxu0
        %1207 = vmatprep.subr.bf16.mxu0 0
        %1208 = vmatpush1.bf16.msra.mxu0 %v1157
        %1209 = vmatprep.subr.bf16.mxu0 0
        %1210 = vmatpush1.bf16.msra.mxu0 0
        %1211 = vmatprep.subr.bf16.mxu0 0
        %1212 = vmatpush1.bf16.msra.mxu0 0
        %1213 = vmatprep.subr.bf16.mxu0 0
        %1214 = vmatpush1.bf16.msra.mxu0 0
        %1215 = vmatprep.subr.bf16.mxu0 0
        %1216 = vmatpush1.bf16.msra.mxu0 0
        %1217 = vmatprep.subr.bf16.mxu0 0
        %1218 = vmatpush1.bf16.msra.mxu0 0
        %1219 = vmatprep.subr.bf16.mxu0 0
        %1220 = vmatpush1.bf16.msra.mxu0 0
        %1221 = vmatprep.subr.bf16.mxu0 0
        %1222 = vmatpush1.bf16.msra.mxu0 0
        %1223 = vmatprep.subr.bf16.mxu0 0
        %1224 = vmatpush1.bf16.msra.mxu0 0
        %1225 = vmatprep.subr.bf16.mxu0 0
        %1226 = vmatpush1.bf16.msra.mxu0 0
        %1227 = vmatprep.subr.bf16.mxu0 0
        %1228 = vmatpush1.bf16.msra.mxu0 0
        %1229 = vmatprep.subr.bf16.mxu0 0
        %1230 = vmatpush1.bf16.msra.mxu0 0
        %1231 = vmatprep.subr.bf16.mxu0 0
        %1232 = vmatpush1.bf16.msra.mxu0 0
        %1233 = vmatprep.subr.bf16.mxu0 0
        %1234 = vmatpush1.bf16.msra.mxu0 0
        %1235 = vmatprep.subr.bf16.mxu0 0
        %1236 = vmatpush1.bf16.msra.mxu0 0
        %1237 = vmatprep.subr.bf16.mxu0 0
        %1238 = vmatpush1.bf16.msra.mxu0 0
        %1239 = vmatprep.mubr.bf16.mxu0 0
        %1240 = vmatmul.mubr.bf16.gmra.mrb[0].mxu0 %v1162
        %v1241 = vpop.f32.mrb[0].mxu0
        %v1242 = vadd.f32 0.0, %v1241
        %v1243 = vpop.f32.mrb[0].mxu0
        %v1244 = vpop.f32.mrb[0].mxu0
        %v1245 = vadd.f32 0.0, %v1244
        %v1246 = vpop.f32.mrb[0].mxu0
        %1247 = vdwg.mxu0
        %v1248 = vadd.f32 %v1132, %v1199
        %v1249 = vadd.f32 %v1133, %v1201
        %v1250 = vadd.f32 %v1134, %v1242
        %v1251 = vadd.f32 %v1135, %v1203
        %v1252 = vadd.f32 %v1136, %v1205
        %v1253 = vadd.f32 %v1137, %v1245
        %s1254 = scalar_lea.vmem %s2, 64
        %v1255 = vld [vmem:[%s1254] sm:$0xf]
        %v1256 = vld [vmem:[%s1254 + $0x4] sm:$0xf]
        %v1259 = vunpack.c.l.b16 %v1255
        %v1260 = vunpack.c.l.b16 %v1256
        %v1261 = vpack.c.b16 %v1260, %v1259
        %1262 = vrot.lane.b32.xlu0 %v342, 90
        %v1263 = vpop.permute.xlu0 %1262
        %1264 = vrot.lane.b32.xlu0 %v343, 90
        %v1265 = vpop.permute.xlu0 %1264
        %1266 = vrot.lane.b32.xlu0 %v344, 90
        %v1267 = vpop.permute.xlu0 %1266
        %1268 = vrot.lane.b32.xlu0 %v352, 90
        %v1269 = vpop.permute.xlu0 %1268
        %vm1270 = vcmask 736256
        %v1271 = vsel %vm1270, %v1263, %v1265
        %v1272 = vsel %vm1270, %v1265, %v1267
        %v1273 = vsel %vm1270, %v1267, %v1269
        %v1278 = vsel %vm378, %v1261, 0
        %1280 = vmatprep.subr.bf16.mxu0 %v1272
        %1281 = vmatpush1.bf16.msra.mxu0 %v1271
        %1282 = vmatprep.subr.bf16.mxu0 0
        %1283 = vmatpush1.bf16.msra.mxu0 0
        %1284 = vmatprep.subr.bf16.mxu0 0
        %1285 = vmatpush1.bf16.msra.mxu0 0
        %1286 = vmatprep.subr.bf16.mxu0 0
        %1287 = vmatpush1.bf16.msra.mxu0 0
        %1288 = vmatprep.subr.bf16.mxu0 0
        %1289 = vmatpush1.bf16.msra.mxu0 0
        %1290 = vmatprep.subr.bf16.mxu0 0
        %1291 = vmatpush1.bf16.msra.mxu0 0
        %1292 = vmatprep.subr.bf16.mxu0 0
        %1293 = vmatpush1.bf16.msra.mxu0 0
        %1294 = vmatprep.subr.bf16.mxu0 0
        %1295 = vmatpush1.bf16.msra.mxu0 0
        %1296 = vmatprep.subr.bf16.mxu0 0
        %1297 = vmatpush1.bf16.msra.mxu0 0
        %1298 = vmatprep.subr.bf16.mxu0 0
        %1299 = vmatpush1.bf16.msra.mxu0 0
        %1300 = vmatprep.subr.bf16.mxu0 0
        %1301 = vmatpush1.bf16.msra.mxu0 0
        %1302 = vmatprep.subr.bf16.mxu0 0
        %1303 = vmatpush1.bf16.msra.mxu0 0
        %1304 = vmatprep.subr.bf16.mxu0 0
        %1305 = vmatpush1.bf16.msra.mxu0 0
        %1306 = vmatprep.subr.bf16.mxu0 0
        %1307 = vmatpush1.bf16.msra.mxu0 0
        %1308 = vmatprep.subr.bf16.mxu0 0
        %1309 = vmatpush1.bf16.msra.mxu0 0
        %1310 = vmatprep.subr.bf16.mxu0 0
        %1311 = vmatpush1.bf16.msra.mxu0 0
        %1312 = vmatprep.mubr.bf16.mxu0 0
        %1313 = vmatmul.mubr.bf16.gmra.mrb[0].mxu0 %v1278
        %v1314 = vpop.f32.mrb[0].mxu0
        %v1315 = vadd.f32 0.0, %v1314
        %v1316 = vpop.f32.mrb[0].mxu0
        %v1317 = vadd.f32 0.0, %v1316
        %v1318 = vpop.f32.mrb[0].mxu0
        %v1319 = vadd.f32 0.0, %v1318
        %v1320 = vpop.f32.mrb[0].mxu0
        %v1321 = vadd.f32 0.0, %v1320
        %1322 = vdwg.mxu0
        %1323 = vmatprep.subr.bf16.mxu0 0
        %1324 = vmatpush1.bf16.msra.mxu0 %v1273
        %1325 = vmatprep.subr.bf16.mxu0 0
        %1326 = vmatpush1.bf16.msra.mxu0 0
        %1327 = vmatprep.subr.bf16.mxu0 0
        %1328 = vmatpush1.bf16.msra.mxu0 0
        %1329 = vmatprep.subr.bf16.mxu0 0
        %1330 = vmatpush1.bf16.msra.mxu0 0
        %1331 = vmatprep.subr.bf16.mxu0 0
        %1332 = vmatpush1.bf16.msra.mxu0 0
        %1333 = vmatprep.subr.bf16.mxu0 0
        %1334 = vmatpush1.bf16.msra.mxu0 0
        %1335 = vmatprep.subr.bf16.mxu0 0
        %1336 = vmatpush1.bf16.msra.mxu0 0
        %1337 = vmatprep.subr.bf16.mxu0 0
        %1338 = vmatpush1.bf16.msra.mxu0 0
        %1339 = vmatprep.subr.bf16.mxu0 0
        %1340 = vmatpush1.bf16.msra.mxu0 0
        %1341 = vmatprep.subr.bf16.mxu0 0
        %1342 = vmatpush1.bf16.msra.mxu0 0
        %1343 = vmatprep.subr.bf16.mxu0 0
        %1344 = vmatpush1.bf16.msra.mxu0 0
        %1345 = vmatprep.subr.bf16.mxu0 0
        %1346 = vmatpush1.bf16.msra.mxu0 0
        %1347 = vmatprep.subr.bf16.mxu0 0
        %1348 = vmatpush1.bf16.msra.mxu0 0
        %1349 = vmatprep.subr.bf16.mxu0 0
        %1350 = vmatpush1.bf16.msra.mxu0 0
        %1351 = vmatprep.subr.bf16.mxu0 0
        %1352 = vmatpush1.bf16.msra.mxu0 0
        %1353 = vmatprep.subr.bf16.mxu0 0
        %1354 = vmatpush1.bf16.msra.mxu0 0
        %1355 = vmatprep.mubr.bf16.mxu0 0
        %1356 = vmatmul.mubr.bf16.gmra.mrb[0].mxu0 %v1278
        %v1357 = vpop.f32.mrb[0].mxu0
        %v1358 = vadd.f32 0.0, %v1357
        %v1359 = vpop.f32.mrb[0].mxu0
        %v1360 = vpop.f32.mrb[0].mxu0
        %v1361 = vadd.f32 0.0, %v1360
        %v1362 = vpop.f32.mrb[0].mxu0
        %1363 = vdwg.mxu0
        %v1364 = vadd.f32 %v1248, %v1315
        %v1365 = vadd.f32 %v1249, %v1317
        %v1366 = vadd.f32 %v1250, %v1358
        %v1367 = vadd.f32 %v1251, %v1319
        %v1368 = vadd.f32 %v1252, %v1321
        %v1369 = vadd.f32 %v1253, %v1361
        %v1370 = vld [vmem:[%s3] sm:$0xff]
        %v1371 = vld [vmem:[%s3 + $0x8] sm:$0xff]
        %1373 = vset.pattern.permute.xlu0 0
        %1374 = vperm.xlu0 %1373, %v1370
        %v1375 = vpop.permute.xlu0 %1374
        %1378 = vset.pattern.permute.xlu0 0
        %1379 = vperm.xlu0 %1378, %v1371
        %v1380 = vpop.permute.xlu0 %1379
        %v1382 = vadd.f32 %v1364, %v1375
        %v1383 = vadd.f32 %v1365, %v1375
        %v1384 = vadd.f32 %v1366, %v1375
        %v1385 = vadd.f32 %v1367, %v1380
        %v1386 = vadd.f32 %v1368, %v1380
        %v1387 = vadd.f32 %v1369, %v1380
        %v1388 = vxor.u32 %v1382, 2147483648
        %v1389 = vxor.u32 %v1383, 2147483648
        %v1390 = vxor.u32 %v1384, 2147483648
        %v1391 = vxor.u32 %v1385, 2147483648
        %v1392 = vxor.u32 %v1386, 2147483648
        %v1393 = vxor.u32 %v1387, 2147483648
        %v1394 = vmul.f32 %v1388, 1.442695
        %v1395 = vpow.pop %v1394
        %v1396 = vmul.f32 %v1389, 1.442695
        %v1397 = vpow.pop %v1396
        %v1398 = vmul.f32 %v1390, 1.442695
        %v1399 = vpow.pop %v1398
        %v1400 = vmul.f32 %v1391, 1.442695
        %v1401 = vpow.pop %v1400
        %v1402 = vmul.f32 %v1392, 1.442695
        %v1403 = vpow.pop %v1402
        %v1404 = vmul.f32 %v1393, 1.442695
        %v1405 = vpow.pop %v1404
        %v1406 = vadd.f32 %v1395, 1.0
        %v1407 = vadd.f32 %v1397, 1.0
        %v1408 = vadd.f32 %v1399, 1.0
        %v1409 = vadd.f32 %v1401, 1.0
        %v1410 = vadd.f32 %v1403, 1.0
        %v1411 = vadd.f32 %v1405, 1.0
        %v1412 = vrcp.pop %v1406
        %v1413 = vmul.f32 1.0, %v1412
        %v1414 = vrcp.pop %v1407
        %v1415 = vmul.f32 1.0, %v1414
        %v1416 = vrcp.pop %v1408
        %v1417 = vmul.f32 1.0, %v1416
        %v1418 = vrcp.pop %v1409
        %v1419 = vmul.f32 1.0, %v1418
        %v1420 = vrcp.pop %v1410
        %v1421 = vmul.f32 1.0, %v1420
        %v1422 = vrcp.pop %v1411
        %v1423 = vmul.f32 1.0, %v1422
        %v1424 = vmul.f32 %v1382, %v1413
        %v1425 = vmul.f32 %v1383, %v1415
        %v1426 = vmul.f32 %v1384, %v1417
        %v1427 = vmul.f32 %v1385, %v1419
        %v1428 = vmul.f32 %v1386, %v1421
        %v1429 = vmul.f32 %v1387, %v1423
        %v1430 = vpack.c.bf16 %v1427, %v1424
        %v1431 = vpack.c.bf16 %v1428, %v1425
        %v1432 = vpack.c.bf16 %v1429, %v1426
        %v1436 = vunpack.c.l.b16 %v1430
        %v1437 = vunpack.c.l.b16 %v1431
        %v1438 = vunpack.c.l.b16 %v1432
        %v1439 = vunpack.c.h.b16 %v1430
        %v1440 = vunpack.c.h.b16 %v1431
        %v1441 = vunpack.c.h.b16 %v1432
        %v1442 = vpack.c.b16 %v1437, %v1436
        %v1443 = vpack.c.b16 %v1438, %v1438
        %v1444 = vpack.c.b16 %v1440, %v1439
        %v1445 = vpack.c.b16 %v1441, %v1441
        %1450 = vst [vmem:[%s323] sm:$0xff] %v1442
        %1451 = vst [vmem:[%s323 + $0x8] sm:$0xf] %v1443
        %1452 = vst [vmem:[%s323 + $0xc] sm:$0xff] %v1444
        %1453 = vst [vmem:[%s323 + $0x14] sm:$0xf] %v1445
        %s1454 = smul.u32 3, %s20
        %p1455 = scmp.lt.s32.totalorder %s19, 1
        %s1456 = scalar_select %p1455, %s19, 1
        %p1457 = scmp.lt.s32.totalorder %s1454, 2
        %s1458 = scalar_select %p1457, %s1454, 2
        %s1459 = smul.addr %s1456, 6
        %s1460 = sadd.s32 %s1458, %s1459
        %s1461 = smul.addr %s1460, 4
        %s1462 = scalar_lea.vmem %s4, %s1461
        // Predicated region
        $region89: #{cnn_block_forward.1} parent=79 // pred_check
          %p1463 = pneg %p147
        $region90: #{cnn_block_forward.1} parent=79 // pred_check_branch
          %1465 = sbr.rel (%p1463) target = $region92
        $region91: #{cnn_block_forward.1} parent=79 // pred_region
          %s1466 = smul.u32 3, %s20
        $region92: #{cnn_block_forward.1} parent=79 // pred_fallthru
          _
      $region80: #{cnn_block_forward.1} parent=5 // pred_fallthru
        _
      %p1467 = scmp.le.s32.totalorder 2, %s10
      // Predicated region
      $region93: #{cnn_block_forward.1} parent=5 // pred_check
        %p1468 = pneg %p1467
      $region94: #{cnn_block_forward.1} parent=5 // pred_check_branch
        %1470 = sbr.rel (%p1468) target = $region96
      $region95: #{cnn_block_forward.1} parent=5 // pred_region
        %s1471 = ssub.s32 %s10, 2
        // Predicated region
        $region97: #{cnn_block_forward.1} parent=95 // pred_check
          %p1472 = pneg %p153
        $region98: #{cnn_block_forward.1} parent=95 // pred_check_branch
          %1474 = sbr.rel (%p1472) target = $region100
        $region99: #{cnn_block_forward.1} parent=95 // pred_region
          %s1475 = smul.u32 3, %s22
          %p1476 = scmp.lt.s32.totalorder %s21, 1
          %s1477 = scalar_select %p1476, %s21, 1
          %p1478 = scmp.lt.s32.totalorder %s1475, 2
          %s1479 = scalar_select %p1478, %s1475, 2
          %s1480 = smul.addr %s1477, 6
          %s1481 = sadd.s32 %s1479, %s1480
          %s1482 = smul.addr %s1481, 4
          %s1483 = scalar_lea.vmem %s4, %s1482
        $region100: #{cnn_block_forward.1} parent=95 // pred_fallthru
          _
      $region96: #{cnn_block_forward.1} parent=5 // pred_fallthru
        _
    $region6: #{cnn_block_forward.1} parent=1 // loop_footer
      %s14 = sadd.s32 1, %s10
    $region7: #{cnn_block_forward.1} parent=1 // loop_footer_branch
      %9 = sbr.rel target = $region3
    $region8: #{cnn_block_forward.1} parent=1 // loop_exit
      _

</llo_original>
